<compile_context>
chip_gen: v7x
topology: tpu7x:2x2x1
jax: 0.10.0
libtpu: 0.0.40
codegen_flags: <defaults>
</compile_context>

<pallas_src>
import jax
import jax.numpy as jnp
import numpy as np
from jax import lax
from jax.experimental import pallas as pl
from jax.experimental.pallas import tpu as pltpu

# Same (highest) f32 precision for in-kernel MXU dots and the XLA reference convs.
jax.config.update("jax_default_matmul_precision", "highest")


def _relu6(v):
    return jnp.clip(v, 0.0, 6.0)


def unet_bottleneck_kernel(xp_ref, w1_ref, s1_ref, b1_ref,
                           w2_ref, s2_ref, b2_ref,
                           w3_ref, s3_ref, b3_ref,
                           o_ref, y_ref):
    # xp_ref : (1, D, H, (W+2)*Cin)  one batch element, W pre-padded, lane dim folded
    # w1_ref : ((W+2)*Cin, W*Cout)   banded conv1 matrix
    # w2_ref : (3, 3, W*Cout)        depthwise weights tiled across W
    # w3_ref : (W*Cout, W*Cout)      block-diagonal pointwise matrix
    # s*/b*  : (1, W*Cout)           folded BN scale/bias tiled across W
    # o_ref  : (1, D, H, W*Cout)
    # y_ref  : (D+2, H+2, W*Cout)    scratch: conv1 output with zero D/H halo
    _, D, H, WCp = xp_ref.shape
    WC = o_ref.shape[-1]

    # ---- conv1: (1,1,3) conv + BN + ReLU6 as one lane-dense MXU matmul ----------
    x_flat = xp_ref[0].reshape(D * H, WCp)
    z1 = jnp.dot(x_flat, w1_ref[...], preferred_element_type=jnp.float32)
    y = _relu6(z1 * s1_ref[...] + b1_ref[...])              # (D*H, WC)

    # Zero only the halo; the interior is fully overwritten every grid step.
    zrow = jnp.zeros((1, H + 2, WC), jnp.float32)
    y_ref[0:1, :, :] = zrow
    y_ref[D + 1:D + 2, :, :] = zrow
    zcol = jnp.zeros((D, 1, WC), jnp.float32)
    y_ref[1:D + 1, 0:1, :] = zcol
    y_ref[1:D + 1, H + 1:H + 2, :] = zcol
    y_ref[1:D + 1, 1:H + 1, :] = y.reshape(D, H, WC)

    # ---- conv2_1: depthwise (3,3,1) + BN + ReLU6 as 9 lane-dense VPU FMAs -------
    w2 = w2_ref[...]                                        # (3, 3, WC)
    acc = jnp.zeros((D, H, WC), jnp.float32)
    for kd in range(3):
        for kh in range(3):
            acc = acc + y_ref[kd:kd + D, kh:kh + H, :] * w2[kd, kh]
    y1 = _relu6(acc * s2_ref[...] + b2_ref[...])            # (D, H, WC)

    # ---- conv2_2: pointwise + BN + ReLU6 + sigmoid (block-diagonal MXU matmul) --
    # Read y back from the scratch interior to keep the live vreg set small.
    y_int = y_ref[1:D + 1, 1:H + 1, :]                      # (D, H, WC)
    z2 = jnp.dot(y_int.reshape(D * H, WC), w3_ref[...],
                 preferred_element_type=jnp.float32)
    gate = jax.nn.sigmoid(_relu6(z2 * s3_ref[...] + b3_ref[...]))

    # ---- fuse: x1 + sigmoid(x2) * x ---------------------------------------------
    o_ref[0] = y1 + gate.reshape(D, H, WC) * y_int


def unet_block_encode_bottleneck(x_ncdhw, p):
    """x_ncdhw: (N, Cin, D, H, W) float32 -> (N, Cout, D, H, W) float32."""
    x = jnp.transpose(x_ncdhw, (0, 2, 3, 4, 1)).astype(jnp.float32)   # NDHWC
    N, D, H, W, Cin = x.shape
    WC = p["s1"].shape[-1]
    Cout = WC // W

    # Pad W (conv1 halo) in the wrapper and fold (W+2, Cin) into the lane dim.
    xp = jnp.pad(x, ((0, 0), (0, 0), (0, 0), (1, 1), (0, 0)))
    WCp = (W + 2) * Cin
    xp = xp.reshape(N, D, H, WCp)

    out = pl.pallas_call(
        unet_bottleneck_kernel,
        out_shape=jax.ShapeDtypeStruct((N, D, H, WC), jnp.float32),
        grid_spec=pltpu.PrefetchScalarGridSpec(
            num_scalar_prefetch=0,
            grid=(N,),
            in_specs=[
                pl.BlockSpec((1, D, H, WCp), lambda n: (n, 0, 0, 0)),
                pl.BlockSpec((WCp, WC), lambda n: (0, 0)),
                pl.BlockSpec((1, WC), lambda n: (0, 0)),
                pl.BlockSpec((1, WC), lambda n: (0, 0)),
                pl.BlockSpec((3, 3, WC), lambda n: (0, 0, 0)),
                pl.BlockSpec((1, WC), lambda n: (0, 0)),
                pl.BlockSpec((1, WC), lambda n: (0, 0)),
                pl.BlockSpec((WC, WC), lambda n: (0, 0)),
                pl.BlockSpec((1, WC), lambda n: (0, 0)),
                pl.BlockSpec((1, WC), lambda n: (0, 0)),
            ],
            out_specs=pl.BlockSpec((1, D, H, WC), lambda n: (n, 0, 0, 0)),
            scratch_shapes=[
                pltpu.VMEM((D + 2, H + 2, WC), jnp.float32),
            ],
        ),
        compiler_params=pltpu.CompilerParams(
            dimension_semantics=("parallel",),
            vmem_limit_bytes=32 * 1024 * 1024,
        ),
    )(xp, p["w1m"], p["s1"], p["b1"], p["w2t"], p["s2"], p["b2"],
      p["w3m"], p["s3"], p["b3"])

    out = out.reshape(N, D, H, W, Cout)
    return jnp.transpose(out, (0, 4, 1, 2, 3))   # back to NCDHW


# ----------------------------- parameters ------------------------------------
def _fold_bn(gamma, beta, mean, var, eps=1e-5):
    scale = gamma / jnp.sqrt(var + eps)
    bias = beta - mean * scale
    return scale, bias


def init_params(key, cin, cout):
    ks = jax.random.split(key, 6)
    # torch-layout conv weights
    w1 = 0.2 * jax.random.normal(ks[0], (cout, cin, 1, 1, 3), jnp.float32)
    w2 = 0.2 * jax.random.normal(ks[1], (cout, 1, 3, 3, 1), jnp.float32)
    w3 = 0.2 * jax.random.normal(ks[2], (cout, cout, 1, 1, 1), jnp.float32)

    def bn(k):
        k1, k2, k3, k4 = jax.random.split(k, 4)
        gamma = 1.0 + 0.1 * jax.random.normal(k1, (cout,), jnp.float32)
        beta = 0.1 * jax.random.normal(k2, (cout,), jnp.float32)
        mean = 0.1 * jax.random.normal(k3, (cout,), jnp.float32)
        var = 0.5 + jax.random.uniform(k4, (cout,), jnp.float32)
        return (gamma, beta, mean, var)

    return dict(w1=w1, w2=w2, w3=w3, bn1=bn(ks[3]), bn2=bn(ks[4]), bn3=bn(ks[5]))


def pack_params(raw, W):
    """Repack torch-layout params into the lane-dense (W*C folded) kernel layout."""
    w1_knc = jnp.transpose(raw["w1"][:, :, 0, 0, :], (2, 1, 0))   # (3, Cin, Cout)
    w2_hwc = jnp.transpose(raw["w2"][:, 0, :, :, 0], (1, 2, 0))   # (3, 3, Cout)
    w3_cc = jnp.transpose(raw["w3"][:, :, 0, 0, 0], (1, 0))       # (Cin=Cout, Cout)
    K, Cin, Cout = w1_knc.shape

    # Banded conv1 matrix: ((W+2)*Cin, W*Cout), row (w+kw)*Cin+ci, col w*Cout+co.
    w1m = jnp.zeros(((W + K - 1) * Cin, W * Cout), jnp.float32)
    for w in range(W):
        for kw in range(K):
            w1m = w1m.at[(w + kw) * Cin:(w + kw + 1) * Cin,
                         w * Cout:(w + 1) * Cout].set(w1_knc[kw])

    # Block-diagonal pointwise matrix: (W*Cout, W*Cout).
    w3m = jnp.zeros((W * Cout, W * Cout), jnp.float32)
    for w in range(W):
        w3m = w3m.at[w * Cout:(w + 1) * Cout,
                     w * Cout:(w + 1) * Cout].set(w3_cc)

    # Depthwise weights tiled across W: (3, 3, W*Cout).
    w2t = jnp.tile(w2_hwc, (1, 1, W))

    def tile_bn(bn):
        s, b = _fold_bn(*bn)
        return (jnp.tile(s, W).reshape(1, W * Cout),
                jnp.tile(b, W).reshape(1, W * Cout))

    s1, b1 = tile_bn(raw["bn1"])
    s2, b2 = tile_bn(raw["bn2"])
    s3, b3 = tile_bn(raw["bn3"])
    return dict(w1m=w1m, w2t=w2t, w3m=w3m,
                s1=s1, b1=b1, s2=s2, b2=b2, s3=s3, b3=b3)


# ------------------------- pure-JAX reference ---------------------------------
def _bn_apply(v, p, eps=1e-5):
    gamma, beta, mean, var = p
    return (v - mean) / jnp.sqrt(var + eps) * gamma + beta


def ref_forward(x_ncdhw, raw):
    x = jnp.transpose(x_ncdhw, (0, 2, 3, 4, 1)).astype(jnp.float32)  # NDHWC
    dn = ("NDHWC", "DHWIO", "NDHWC")
    cout = raw["w1"].shape[0]

    w1 = jnp.transpose(raw["w1"], (2, 3, 4, 1, 0))                   # (1,1,3,Cin,Cout)
    y = lax.conv_general_dilated(x, w1, (1, 1, 1),
                                 ((0, 0), (0, 0), (1, 1)),
                                 dimension_numbers=dn)
    y = _relu6(_bn_apply(y, raw["bn1"]))

    w2 = jnp.transpose(raw["w2"], (2, 3, 4, 1, 0))                   # (3,3,1,1,Cout)
    y1 = lax.conv_general_dilated(y, w2, (1, 1, 1),
                                  ((1, 1), (1, 1), (0, 0)),
                                  dimension_numbers=dn,
                                  feature_group_count=cout)
    y1 = _relu6(_bn_apply(y1, raw["bn2"]))

    w3 = jnp.transpose(raw["w3"], (2, 3, 4, 1, 0))                   # (1,1,1,Cout,Cout)
    y2 = lax.conv_general_dilated(y, w3, (1, 1, 1),
                                  ((0, 0), (0, 0), (0, 0)),
                                  dimension_numbers=dn)
    y2 = jax.nn.sigmoid(_relu6(_bn_apply(y2, raw["bn3"])))

    out = y1 + y2 * y
    return jnp.transpose(out, (0, 4, 1, 2, 3))                       # NCDHW


if __name__ == "__main__":
    N, Cin, Cout, D, H, W = 2, 4, 8, 4, 8, 16
    key = jax.random.PRNGKey(0)
    k_x, k_p = jax.random.split(key)
    x = jax.random.normal(k_x, (N, Cin, D, H, W), jnp.float32)       # NCDHW input
    raw = init_params(k_p, Cin, Cout)
    packed = pack_params(raw, W)

    out = jax.jit(unet_block_encode_bottleneck)(x, packed)
    out = jax.block_until_ready(out)

    ref = ref_forward(x, raw)
    np.testing.assert_allclose(np.asarray(out), np.asarray(ref),
                               atol=1e-3, rtol=1e-3)
    print("KERNEL_OK")
</pallas_src>

<mosaic_0001>
module attributes {stable_mosaic.version = 11 : i64} {
  func.func @unet_bottleneck_kernel(%arg0: i32, %arg1: memref<1x4x8x72xf32, #tpu.memory_space<vmem>>, %arg2: memref<72x128xf32, #tpu.memory_space<vmem>>, %arg3: memref<1x128xf32, #tpu.memory_space<vmem>>, %arg4: memref<1x128xf32, #tpu.memory_space<vmem>>, %arg5: memref<3x3x128xf32, #tpu.memory_space<vmem>>, %arg6: memref<1x128xf32, #tpu.memory_space<vmem>>, %arg7: memref<1x128xf32, #tpu.memory_space<vmem>>, %arg8: memref<128x128xf32, #tpu.memory_space<vmem>>, %arg9: memref<1x128xf32, #tpu.memory_space<vmem>>, %arg10: memref<1x128xf32, #tpu.memory_space<vmem>>, %arg11: memref<1x4x8x128xf32, #tpu.memory_space<vmem>>, %arg12: memref<6x10x128xf32, #tpu.memory_space<vmem>>) attributes {dimension_semantics = [#tpu.dimension_semantics<parallel>], iteration_bounds = array<i64: 2>, scalar_prefetch = 0 : i64, scratch_operands = 1 : i64, tpu.core_type = #tpu.core_type<tc>, window_params = [{transform_indices = @transform_0, window_bounds = array<i64: 1, 4, 8, 72>}, {pipeline_mode = #tpu.pipeline_mode<synchronous>, transform_indices = @transform_1, window_bounds = array<i64: 72, 128>}, {pipeline_mode = #tpu.pipeline_mode<synchronous>, transform_indices = @transform_2, window_bounds = array<i64: 1, 128>}, {pipeline_mode = #tpu.pipeline_mode<synchronous>, transform_indices = @transform_3, window_bounds = array<i64: 1, 128>}, {pipeline_mode = #tpu.pipeline_mode<synchronous>, transform_indices = @transform_4, window_bounds = array<i64: 3, 3, 128>}, {pipeline_mode = #tpu.pipeline_mode<synchronous>, transform_indices = @transform_5, window_bounds = array<i64: 1, 128>}, {pipeline_mode = #tpu.pipeline_mode<synchronous>, transform_indices = @transform_6, window_bounds = array<i64: 1, 128>}, {pipeline_mode = #tpu.pipeline_mode<synchronous>, transform_indices = @transform_7, window_bounds = array<i64: 128, 128>}, {pipeline_mode = #tpu.pipeline_mode<synchronous>, transform_indices = @transform_8, window_bounds = array<i64: 1, 128>}, {pipeline_mode = #tpu.pipeline_mode<synchronous>, transform_indices = @transform_9, window_bounds = array<i64: 1, 128>}, {transform_indices = @transform_10, window_bounds = array<i64: 1, 4, 8, 128>}]} {
    %c0 = arith.constant 0 : index
    %c0_0 = arith.constant 0 : index
    %c0_1 = arith.constant 0 : index
    %c0_2 = arith.constant 0 : index
    %0 = vector.load %arg1[%c0, %c0_0, %c0_1, %c0_2] : memref<1x4x8x72xf32, #tpu.memory_space<vmem>>, vector<1x4x8x72xf32>
    %1 = vector.shape_cast %0 : vector<1x4x8x72xf32> to vector<4x8x72xf32>
    %2 = vector.shape_cast %1 : vector<4x8x72xf32> to vector<32x72xf32>
    %c0_3 = arith.constant 0 : index
    %c0_4 = arith.constant 0 : index
    %3 = vector.load %arg2[%c0_3, %c0_4] : memref<72x128xf32, #tpu.memory_space<vmem>>, vector<72x128xf32>
    %cst = arith.constant dense<0.000000e+00> : vector<32x128xf32>
    %4 = tpu.matmul %2, %3, %cst {dimension_numbers = #tpu.dot_dimension_numbers<[1], [0], [0], [1], [0, 0, 1, 1], [], []>, precision = #tpu.contract_precision<fp32>} : vector<32x72xf32>, vector<72x128xf32>, vector<32x128xf32> -> vector<32x128xf32>
    %c0_5 = arith.constant 0 : index
    %c0_6 = arith.constant 0 : index
    %5 = vector.load %arg3[%c0_5, %c0_6] : memref<1x128xf32, #tpu.memory_space<vmem>>, vector<1x128xf32>
    %6 = vector.broadcast %5 : vector<1x128xf32> to vector<32x128xf32>
    %7 = arith.mulf %4, %6 : vector<32x128xf32>
    %c0_7 = arith.constant 0 : index
    %c0_8 = arith.constant 0 : index
    %8 = vector.load %arg4[%c0_7, %c0_8] : memref<1x128xf32, #tpu.memory_space<vmem>>, vector<1x128xf32>
    %9 = vector.broadcast %8 : vector<1x128xf32> to vector<32x128xf32>
    %10 = arith.addf %7, %9 : vector<32x128xf32>
    %cst_9 = arith.constant 0.000000e+00 : f32
    %cst_10 = arith.constant 6.000000e+00 : f32
    %11 = vector.broadcast %cst_9 : f32 to vector<32x128xf32>
    %12 = arith.maximumf %11, %10 : vector<32x128xf32>
    %13 = vector.broadcast %cst_10 : f32 to vector<32x128xf32>
    %14 = arith.minimumf %13, %12 : vector<32x128xf32>
    %cst_11 = arith.constant 0.000000e+00 : f32
    %15 = vector.broadcast %cst_11 : f32 to vector<1x10x128xf32>
    %c0_12 = arith.constant 0 : index
    %c0_13 = arith.constant 0 : index
    %c0_14 = arith.constant 0 : index
    %16 = vector.load %arg12[%c0_12, %c0_13, %c0_14] : memref<6x10x128xf32, #tpu.memory_space<vmem>>, vector<1x10x128xf32>
    tpu.vector_store %arg12[%c0_12, %c0_13, %c0_14], %15 {strides = array<i32>} : memref<6x10x128xf32, #tpu.memory_space<vmem>>, vector<1x10x128xf32>,
    %c5 = arith.constant 5 : index
    %c0_15 = arith.constant 0 : index
    %c0_16 = arith.constant 0 : index
    %17 = vector.load %arg12[%c5, %c0_15, %c0_16] : memref<6x10x128xf32, #tpu.memory_space<vmem>>, vector<1x10x128xf32>
    tpu.vector_store %arg12[%c5, %c0_15, %c0_16], %15 {strides = array<i32>} : memref<6x10x128xf32, #tpu.memory_space<vmem>>, vector<1x10x128xf32>,
    %cst_17 = arith.constant 0.000000e+00 : f32
    %18 = vector.broadcast %cst_17 : f32 to vector<4x1x128xf32>
    %c1 = arith.constant 1 : index
    %c0_18 = arith.constant 0 : index
    %c0_19 = arith.constant 0 : index
    %19 = vector.load %arg12[%c1, %c0_18, %c0_19] : memref<6x10x128xf32, #tpu.memory_space<vmem>>, vector<4x1x128xf32>
    tpu.vector_store %arg12[%c1, %c0_18, %c0_19], %18 {strides = array<i32>} : memref<6x10x128xf32, #tpu.memory_space<vmem>>, vector<4x1x128xf32>,
    %c1_20 = arith.constant 1 : index
    %c9 = arith.constant 9 : index
    %c0_21 = arith.constant 0 : index
    %20 = vector.load %arg12[%c1_20, %c9, %c0_21] : memref<6x10x128xf32, #tpu.memory_space<vmem>>, vector<4x1x128xf32>
    tpu.vector_store %arg12[%c1_20, %c9, %c0_21], %18 {strides = array<i32>} : memref<6x10x128xf32, #tpu.memory_space<vmem>>, vector<4x1x128xf32>,
    %21 = vector.shape_cast %14 : vector<32x128xf32> to vector<4x8x128xf32>
    %c1_22 = arith.constant 1 : index
    %c1_23 = arith.constant 1 : index
    %c0_24 = arith.constant 0 : index
    %22 = vector.load %arg12[%c1_22, %c1_23, %c0_24] : memref<6x10x128xf32, #tpu.memory_space<vmem>>, vector<4x8x128xf32>
    tpu.vector_store %arg12[%c1_22, %c1_23, %c0_24], %21 {strides = array<i32>} : memref<6x10x128xf32, #tpu.memory_space<vmem>>, vector<4x8x128xf32>,
    %c0_25 = arith.constant 0 : index
    %c0_26 = arith.constant 0 : index
    %c0_27 = arith.constant 0 : index
    %23 = vector.load %arg5[%c0_25, %c0_26, %c0_27] : memref<3x3x128xf32, #tpu.memory_space<vmem>>, vector<3x3x128xf32>
    %cst_28 = arith.constant 0.000000e+00 : f32
    %24 = vector.broadcast %cst_28 : f32 to vector<4x8x128xf32>
    %c0_29 = arith.constant 0 : index
    %c0_30 = arith.constant 0 : index
    %c0_31 = arith.constant 0 : index
    %25 = vector.load %arg12[%c0_29, %c0_30, %c0_31] : memref<6x10x128xf32, #tpu.memory_space<vmem>>, vector<4x8x128xf32>
    %26 = vector.extract_strided_slice %23 {offsets = [0, 0, 0], sizes = [1, 1, 128], strides = [1, 1, 1]} : vector<3x3x128xf32> to vector<1x1x128xf32>
    %27 = vector.shape_cast %26 : vector<1x1x128xf32> to vector<128xf32>
    %28 = vector.shape_cast %27 : vector<128xf32> to vector<1x1x128xf32>
    %29 = vector.broadcast %28 : vector<1x1x128xf32> to vector<4x8x128xf32>
    %30 = arith.mulf %25, %29 : vector<4x8x128xf32>
    %31 = arith.addf %24, %30 : vector<4x8x128xf32>
    %c0_32 = arith.constant 0 : index
    %c1_33 = arith.constant 1 : index
    %c0_34 = arith.constant 0 : index
    %32 = vector.load %arg12[%c0_32, %c1_33, %c0_34] : memref<6x10x128xf32, #tpu.memory_space<vmem>>, vector<4x8x128xf32>
    %33 = vector.extract_strided_slice %23 {offsets = [0, 1, 0], sizes = [1, 1, 128], strides = [1, 1, 1]} : vector<3x3x128xf32> to vector<1x1x128xf32>
    %34 = vector.shape_cast %33 : vector<1x1x128xf32> to vector<128xf32>
    %35 = vector.shape_cast %34 : vector<128xf32> to vector<1x1x128xf32>
    %36 = vector.broadcast %35 : vector<1x1x128xf32> to vector<4x8x128xf32>
    %37 = arith.mulf %32, %36 : vector<4x8x128xf32>
    %38 = arith.addf %31, %37 : vector<4x8x128xf32>
    %c0_35 = arith.constant 0 : index
    %c2 = arith.constant 2 : index
    %c0_36 = arith.constant 0 : index
    %39 = vector.load %arg12[%c0_35, %c2, %c0_36] : memref<6x10x128xf32, #tpu.memory_space<vmem>>, vector<4x8x128xf32>
    %40 = vector.extract_strided_slice %23 {offsets = [0, 2, 0], sizes = [1, 1, 128], strides = [1, 1, 1]} : vector<3x3x128xf32> to vector<1x1x128xf32>
    %41 = vector.shape_cast %40 : vector<1x1x128xf32> to vector<128xf32>
    %42 = vector.shape_cast %41 : vector<128xf32> to vector<1x1x128xf32>
    %43 = vector.broadcast %42 : vector<1x1x128xf32> to vector<4x8x128xf32>
    %44 = arith.mulf %39, %43 : vector<4x8x128xf32>
    %45 = arith.addf %38, %44 : vector<4x8x128xf32>
    %c1_37 = arith.constant 1 : index
    %c0_38 = arith.constant 0 : index
    %c0_39 = arith.constant 0 : index
    %46 = vector.load %arg12[%c1_37, %c0_38, %c0_39] : memref<6x10x128xf32, #tpu.memory_space<vmem>>, vector<4x8x128xf32>
    %47 = vector.extract_strided_slice %23 {offsets = [1, 0, 0], sizes = [1, 1, 128], strides = [1, 1, 1]} : vector<3x3x128xf32> to vector<1x1x128xf32>
    %48 = vector.shape_cast %47 : vector<1x1x128xf32> to vector<128xf32>
    %49 = vector.shape_cast %48 : vector<128xf32> to vector<1x1x128xf32>
    %50 = vector.broadcast %49 : vector<1x1x128xf32> to vector<4x8x128xf32>
    %51 = arith.mulf %46, %50 : vector<4x8x128xf32>
    %52 = arith.addf %45, %51 : vector<4x8x128xf32>
    %c1_40 = arith.constant 1 : index
    %c1_41 = arith.constant 1 : index
    %c0_42 = arith.constant 0 : index
    %53 = vector.load %arg12[%c1_40, %c1_41, %c0_42] : memref<6x10x128xf32, #tpu.memory_space<vmem>>, vector<4x8x128xf32>
    %54 = vector.extract_strided_slice %23 {offsets = [1, 1, 0], sizes = [1, 1, 128], strides = [1, 1, 1]} : vector<3x3x128xf32> to vector<1x1x128xf32>
    %55 = vector.shape_cast %54 : vector<1x1x128xf32> to vector<128xf32>
    %56 = vector.shape_cast %55 : vector<128xf32> to vector<1x1x128xf32>
    %57 = vector.broadcast %56 : vector<1x1x128xf32> to vector<4x8x128xf32>
    %58 = arith.mulf %53, %57 : vector<4x8x128xf32>
    %59 = arith.addf %52, %58 : vector<4x8x128xf32>
    %c1_43 = arith.constant 1 : index
    %c2_44 = arith.constant 2 : index
    %c0_45 = arith.constant 0 : index
    %60 = vector.load %arg12[%c1_43, %c2_44, %c0_45] : memref<6x10x128xf32, #tpu.memory_space<vmem>>, vector<4x8x128xf32>
    %61 = vector.extract_strided_slice %23 {offsets = [1, 2, 0], sizes = [1, 1, 128], strides = [1, 1, 1]} : vector<3x3x128xf32> to vector<1x1x128xf32>
    %62 = vector.shape_cast %61 : vector<1x1x128xf32> to vector<128xf32>
    %63 = vector.shape_cast %62 : vector<128xf32> to vector<1x1x128xf32>
    %64 = vector.broadcast %63 : vector<1x1x128xf32> to vector<4x8x128xf32>
    %65 = arith.mulf %60, %64 : vector<4x8x128xf32>
    %66 = arith.addf %59, %65 : vector<4x8x128xf32>
    %c2_46 = arith.constant 2 : index
    %c0_47 = arith.constant 0 : index
    %c0_48 = arith.constant 0 : index
    %67 = vector.load %arg12[%c2_46, %c0_47, %c0_48] : memref<6x10x128xf32, #tpu.memory_space<vmem>>, vector<4x8x128xf32>
    %68 = vector.extract_strided_slice %23 {offsets = [2, 0, 0], sizes = [1, 1, 128], strides = [1, 1, 1]} : vector<3x3x128xf32> to vector<1x1x128xf32>
    %69 = vector.shape_cast %68 : vector<1x1x128xf32> to vector<128xf32>
    %70 = vector.shape_cast %69 : vector<128xf32> to vector<1x1x128xf32>
    %71 = vector.broadcast %70 : vector<1x1x128xf32> to vector<4x8x128xf32>
    %72 = arith.mulf %67, %71 : vector<4x8x128xf32>
    %73 = arith.addf %66, %72 : vector<4x8x128xf32>
    %c2_49 = arith.constant 2 : index
    %c1_50 = arith.constant 1 : index
    %c0_51 = arith.constant 0 : index
    %74 = vector.load %arg12[%c2_49, %c1_50, %c0_51] : memref<6x10x128xf32, #tpu.memory_space<vmem>>, vector<4x8x128xf32>
    %75 = vector.extract_strided_slice %23 {offsets = [2, 1, 0], sizes = [1, 1, 128], strides = [1, 1, 1]} : vector<3x3x128xf32> to vector<1x1x128xf32>
    %76 = vector.shape_cast %75 : vector<1x1x128xf32> to vector<128xf32>
    %77 = vector.shape_cast %76 : vector<128xf32> to vector<1x1x128xf32>
    %78 = vector.broadcast %77 : vector<1x1x128xf32> to vector<4x8x128xf32>
    %79 = arith.mulf %74, %78 : vector<4x8x128xf32>
    %80 = arith.addf %73, %79 : vector<4x8x128xf32>
    %c2_52 = arith.constant 2 : index
    %c2_53 = arith.constant 2 : index
    %c0_54 = arith.constant 0 : index
    %81 = vector.load %arg12[%c2_52, %c2_53, %c0_54] : memref<6x10x128xf32, #tpu.memory_space<vmem>>, vector<4x8x128xf32>
    %82 = vector.extract_strided_slice %23 {offsets = [2, 2, 0], sizes = [1, 1, 128], strides = [1, 1, 1]} : vector<3x3x128xf32> to vector<1x1x128xf32>
    %83 = vector.shape_cast %82 : vector<1x1x128xf32> to vector<128xf32>
    %84 = vector.shape_cast %83 : vector<128xf32> to vector<1x1x128xf32>
    %85 = vector.broadcast %84 : vector<1x1x128xf32> to vector<4x8x128xf32>
    %86 = arith.mulf %81, %85 : vector<4x8x128xf32>
    %87 = arith.addf %80, %86 : vector<4x8x128xf32>
    %c0_55 = arith.constant 0 : index
    %c0_56 = arith.constant 0 : index
    %88 = vector.load %arg6[%c0_55, %c0_56] : memref<1x128xf32, #tpu.memory_space<vmem>>, vector<1x128xf32>
    %89 = vector.shape_cast %88 : vector<1x128xf32> to vector<1x1x128xf32>
    %90 = vector.broadcast %89 : vector<1x1x128xf32> to vector<4x8x128xf32>
    %91 = arith.mulf %87, %90 : vector<4x8x128xf32>
    %c0_57 = arith.constant 0 : index
    %c0_58 = arith.constant 0 : index
    %92 = vector.load %arg7[%c0_57, %c0_58] : memref<1x128xf32, #tpu.memory_space<vmem>>, vector<1x128xf32>
    %93 = vector.shape_cast %92 : vector<1x128xf32> to vector<1x1x128xf32>
    %94 = vector.broadcast %93 : vector<1x1x128xf32> to vector<4x8x128xf32>
    %95 = arith.addf %91, %94 : vector<4x8x128xf32>
    %cst_59 = arith.constant 0.000000e+00 : f32
    %cst_60 = arith.constant 6.000000e+00 : f32
    %96 = vector.broadcast %cst_59 : f32 to vector<4x8x128xf32>
    %97 = arith.maximumf %96, %95 : vector<4x8x128xf32>
    %98 = vector.broadcast %cst_60 : f32 to vector<4x8x128xf32>
    %99 = arith.minimumf %98, %97 : vector<4x8x128xf32>
    %c1_61 = arith.constant 1 : index
    %c1_62 = arith.constant 1 : index
    %c0_63 = arith.constant 0 : index
    %100 = vector.load %arg12[%c1_61, %c1_62, %c0_63] : memref<6x10x128xf32, #tpu.memory_space<vmem>>, vector<4x8x128xf32>
    %101 = vector.shape_cast %100 : vector<4x8x128xf32> to vector<32x128xf32>
    %c0_64 = arith.constant 0 : index
    %c0_65 = arith.constant 0 : index
    %102 = vector.load %arg8[%c0_64, %c0_65] : memref<128x128xf32, #tpu.memory_space<vmem>>, vector<128x128xf32>
    %cst_66 = arith.constant dense<0.000000e+00> : vector<32x128xf32>
    %103 = tpu.matmul %101, %102, %cst_66 {dimension_numbers = #tpu.dot_dimension_numbers<[1], [0], [0], [1], [0, 0, 1, 1], [], []>, precision = #tpu.contract_precision<fp32>} : vector<32x128xf32>, vector<128x128xf32>, vector<32x128xf32> -> vector<32x128xf32>
    %c0_67 = arith.constant 0 : index
    %c0_68 = arith.constant 0 : index
    %104 = vector.load %arg9[%c0_67, %c0_68] : memref<1x128xf32, #tpu.memory_space<vmem>>, vector<1x128xf32>
    %105 = vector.broadcast %104 : vector<1x128xf32> to vector<32x128xf32>
    %106 = arith.mulf %103, %105 : vector<32x128xf32>
    %c0_69 = arith.constant 0 : index
    %c0_70 = arith.constant 0 : index
    %107 = vector.load %arg10[%c0_69, %c0_70] : memref<1x128xf32, #tpu.memory_space<vmem>>, vector<1x128xf32>
    %108 = vector.broadcast %107 : vector<1x128xf32> to vector<32x128xf32>
    %109 = arith.addf %106, %108 : vector<32x128xf32>
    %cst_71 = arith.constant 0.000000e+00 : f32
    %cst_72 = arith.constant 6.000000e+00 : f32
    %110 = vector.broadcast %cst_71 : f32 to vector<32x128xf32>
    %111 = arith.maximumf %110, %109 : vector<32x128xf32>
    %112 = vector.broadcast %cst_72 : f32 to vector<32x128xf32>
    %113 = arith.minimumf %112, %111 : vector<32x128xf32>
    %114 = arith.negf %113 : vector<32x128xf32>
    %115 = math.exp %114 : vector<32x128xf32>
    %cst_73 = arith.constant 1.000000e+00 : f32
    %116 = vector.broadcast %cst_73 : f32 to vector<32x128xf32>
    %117 = arith.addf %116, %115 : vector<32x128xf32>
    %118 = arith.divf %116, %117 : vector<32x128xf32>
    %119 = vector.shape_cast %118 : vector<32x128xf32> to vector<4x8x128xf32>
    %120 = arith.mulf %119, %100 : vector<4x8x128xf32>
    %121 = arith.addf %99, %120 : vector<4x8x128xf32>
    %c0_74 = arith.constant 0 : index
    %c0_75 = arith.constant 0 : index
    %c0_76 = arith.constant 0 : index
    %c0_77 = arith.constant 0 : index
    %122 = vector.load %arg11[%c0_74, %c0_75, %c0_76, %c0_77] : memref<1x4x8x128xf32, #tpu.memory_space<vmem>>, vector<1x4x8x128xf32>
    %123 = vector.shape_cast %122 : vector<1x4x8x128xf32> to vector<4x8x128xf32>
    %124 = vector.shape_cast %121 : vector<4x8x128xf32> to vector<1x4x8x128xf32>
    tpu.vector_store %arg11[%c0_74, %c0_75, %c0_76, %c0_77], %124 {strides = array<i32>} : memref<1x4x8x128xf32, #tpu.memory_space<vmem>>, vector<1x4x8x128xf32>,
    return
  }
  func.func @transform_0(%arg0: i32) -> (i32, i32, i32, i32) {
    %c0_i32 = arith.constant 0 : i32
    %c0_i32_0 = arith.constant 0 : i32
    %c0_i32_1 = arith.constant 0 : i32
    %c0_i32_2 = arith.constant 0 : i32
    return %arg0, %c0_i32, %c0_i32_0, %c0_i32_1 : i32, i32, i32, i32
  }
  func.func @transform_1(%arg0: i32) -> (i32, i32) {
    %c0_i32 = arith.constant 0 : i32
    %c0_i32_0 = arith.constant 0 : i32
    %c0_i32_1 = arith.constant 0 : i32
    return %c0_i32, %c0_i32_0 : i32, i32
  }
  func.func @transform_2(%arg0: i32) -> (i32, i32) {
    %c0_i32 = arith.constant 0 : i32
    %c0_i32_0 = arith.constant 0 : i32
    %c0_i32_1 = arith.constant 0 : i32
    return %c0_i32, %c0_i32_0 : i32, i32
  }
  func.func @transform_3(%arg0: i32) -> (i32, i32) {
    %c0_i32 = arith.constant 0 : i32
    %c0_i32_0 = arith.constant 0 : i32
    %c0_i32_1 = arith.constant 0 : i32
    return %c0_i32, %c0_i32_0 : i32, i32
  }
  func.func @transform_4(%arg0: i32) -> (i32, i32, i32) {
    %c0_i32 = arith.constant 0 : i32
    %c0_i32_0 = arith.constant 0 : i32
    %c0_i32_1 = arith.constant 0 : i32
    %c0_i32_2 = arith.constant 0 : i32
    return %c0_i32, %c0_i32_0, %c0_i32_1 : i32, i32, i32
  }
  func.func @transform_5(%arg0: i32) -> (i32, i32) {
    %c0_i32 = arith.constant 0 : i32
    %c0_i32_0 = arith.constant 0 : i32
    %c0_i32_1 = arith.constant 0 : i32
    return %c0_i32, %c0_i32_0 : i32, i32
  }
  func.func @transform_6(%arg0: i32) -> (i32, i32) {
    %c0_i32 = arith.constant 0 : i32
    %c0_i32_0 = arith.constant 0 : i32
    %c0_i32_1 = arith.constant 0 : i32
    return %c0_i32, %c0_i32_0 : i32, i32
  }
  func.func @transform_7(%arg0: i32) -> (i32, i32) {
    %c0_i32 = arith.constant 0 : i32
    %c0_i32_0 = arith.constant 0 : i32
    %c0_i32_1 = arith.constant 0 : i32
    return %c0_i32, %c0_i32_0 : i32, i32
  }
  func.func @transform_8(%arg0: i32) -> (i32, i32) {
    %c0_i32 = arith.constant 0 : i32
    %c0_i32_0 = arith.constant 0 : i32
    %c0_i32_1 = arith.constant 0 : i32
    return %c0_i32, %c0_i32_0 : i32, i32
  }
  func.func @transform_9(%arg0: i32) -> (i32, i32) {
    %c0_i32 = arith.constant 0 : i32
    %c0_i32_0 = arith.constant 0 : i32
    %c0_i32_1 = arith.constant 0 : i32
    return %c0_i32, %c0_i32_0 : i32, i32
  }
  func.func @transform_10(%arg0: i32) -> (i32, i32, i32, i32) {
    %c0_i32 = arith.constant 0 : i32
    %c0_i32_0 = arith.constant 0 : i32
    %c0_i32_1 = arith.constant 0 : i32
    %c0_i32_2 = arith.constant 0 : i32
    return %arg0, %c0_i32, %c0_i32_0, %c0_i32_1 : i32, i32, i32, i32
  }
}

</mosaic_0001>

<llo_original>
// kernel: unet_block_encode_bottleneck.1
$region0: #{unet_block_encode_bottleneck.1}
  #allocation0 [shape = 'u32[]', space=smem, size = 0x4, offset = 0x4, fixed_abs, tag = 'smem constant byte address 0x4 - core index']
  #allocation1 [shape = 'u32[144,128]{1,0:T(1,128)}', space=vmem, size = 0x12000, scoped, tag = 'internal scratch']
  #allocation2 [shape = 'f32[6,10,128]{2,1,0:T(8,128)}', space=vmem, size = 0xc000, scoped, tag = 'scratch operand']
  %s0 = inlined_call_operand.vmem [shape: f32[2,4,8,72], index: 0, kind: input, shape index: {}]
  %s1 = inlined_call_operand.vmem [shape: f32[72,128], index: 1, kind: input, shape index: {}]
  %s2 = inlined_call_operand.vmem [shape: f32[1,128], index: 2, kind: input, shape index: {}]
  %s3 = inlined_call_operand.vmem [shape: f32[1,128], index: 3, kind: input, shape index: {}]
  %s4 = inlined_call_operand.vmem [shape: f32[3,3,128], index: 4, kind: input, shape index: {}]
  %s5 = inlined_call_operand.vmem [shape: f32[1,128], index: 5, kind: input, shape index: {}]
  %s6 = inlined_call_operand.vmem [shape: f32[1,128], index: 6, kind: input, shape index: {}]
  %s7 = inlined_call_operand.vmem [shape: f32[128,128], index: 7, kind: input, shape index: {}]
  %s8 = inlined_call_operand.vmem [shape: f32[1,128], index: 8, kind: input, shape index: {}]
  %s9 = inlined_call_operand.vmem [shape: f32[1,128], index: 9, kind: input, shape index: {}]
  %s10 = inlined_call_operand.vmem [shape: f32[2,4,8,128], index: 10, kind: output, shape index: {}]
  %s11 = sld [smem:[#allocation0]]
  $region73: #{unet_block_encode_bottleneck.1} parent=0
    _
  %s13 = ssub.s32 1, %s11
  %s14 = scalar_select 0, %s13, %s11
  loop: start=0, step=1, limit=4
  $region2: #{unet_block_encode_bottleneck.1} parent=0 // loop_pre_header
    _
  $region3: #{unet_block_encode_bottleneck.1} parent=0 // loop_header
    %s16 = sphi 0, %s20
    %p17 = scmp.ge.s32.totalorder %s16, 4
    %s26 = sphi 0, %s28
    %s29 = sphi 0, %s26
    %s30 = sphi 0, %s29
    %s46 = sphi 0, %s30
    %s50 = sphi 0, %s50
    %s52 = sphi 0, %s50
    %s53 = sphi 0, %s52
    %s67 = sphi 0, %s53
    %s71 = sphi 0, %s71
    %s73 = sphi 0, %s71
    %s74 = sphi 0, %s73
    %s88 = sphi 0, %s74
    %s92 = sphi 0, %s92
    %s94 = sphi 0, %s92
    %s95 = sphi 0, %s94
    %s109 = sphi 0, %s95
    %s113 = sphi 0, %s113
    %s115 = sphi 0, %s113
    %s116 = sphi 0, %s115
    %s130 = sphi 0, %s116
    %s134 = sphi 0, %s134
    %s136 = sphi 0, %s134
    %s137 = sphi 0, %s136
    %s151 = sphi 0, %s137
    %s155 = sphi 0, %s155
    %s157 = sphi 0, %s155
    %s158 = sphi 0, %s157
    %s172 = sphi 0, %s158
    %s176 = sphi 0, %s176
    %s178 = sphi 0, %s176
    %s179 = sphi 0, %s178
    %s193 = sphi 0, %s179
    %s197 = sphi 0, %s197
    %s199 = sphi 0, %s197
    %s200 = sphi 0, %s199
    %s214 = sphi 0, %s200
    %s218 = sphi 0, %s218
    %s220 = sphi 0, %s218
    %s221 = sphi 0, %s220
    %s235 = sphi 0, %s221
    %s241 = sphi 0, %s243
    %s244 = sphi 0, %s241
    %s245 = sphi 0, %s244
    %s261 = sphi 0, %s245
  $region4: #{unet_block_encode_bottleneck.1} parent=0 // loop_header_branch
    %19 = sbr.rel (%p17) target = $region8
  $region5: #{unet_block_encode_bottleneck.1} parent=0 // loop_body
    %s21 = ssub.s32 %s16, 1
    %s22 = ssub.s32 %s16, 2
    %s23 = sadd.s32 %s16, 1
    %s24 = ssub.s32 %s16, %s23
    %p25 = scmp.eq.s32.totalorder %s24, 0
    %s27 = sadd.s32 %s26, 1
    %s28 = scalar_select %p25, %s26, %s27
    %p31 = pneg %p25
    %p32 = scmp.eq.s32.totalorder %s16, 1
    %p33 = por %p31, %p32
    %p34 = scmp.ne.s32.totalorder %s26, %s29
    %p35 = scmp.eq.s32.totalorder %s16, 0
    %p36 = por %p34, %p35
    %p37 = scmp.ne.s32.totalorder %s26, %s29
    %p38 = scmp.eq.s32.totalorder %s21, 1
    %p39 = por %p37, %p38
    %p40 = scmp.ne.s32.totalorder %s29, %s30
    %p41 = scmp.eq.s32.totalorder %s21, 0
    %p42 = por %p40, %p41
    %p43 = scmp.ne.s32.totalorder %s29, %s30
    %p44 = scmp.eq.s32.totalorder %s22, 1
    %p45 = por %p43, %p44
    %p47 = scmp.ne.s32.totalorder %s30, %s46
    %p48 = scmp.eq.s32.totalorder %s22, 0
    %p49 = por %p47, %p48
    %s51 = sadd.s32 %s50, 1
    %p54 = scmp.eq.s32.totalorder %s16, 1
    %p55 = scmp.ne.s32.totalorder %s50, %s52
    %p56 = scmp.eq.s32.totalorder %s16, 0
    %p57 = por %p55, %p56
    %p58 = scmp.ne.s32.totalorder %s50, %s52
    %p59 = scmp.eq.s32.totalorder %s21, 1
    %p60 = por %p58, %p59
    %p61 = scmp.ne.s32.totalorder %s52, %s53
    %p62 = scmp.eq.s32.totalorder %s21, 0
    %p63 = por %p61, %p62
    %p64 = scmp.ne.s32.totalorder %s52, %s53
    %p65 = scmp.eq.s32.totalorder %s22, 1
    %p66 = por %p64, %p65
    %p68 = scmp.ne.s32.totalorder %s53, %s67
    %p69 = scmp.eq.s32.totalorder %s22, 0
    %p70 = por %p68, %p69
    %s72 = sadd.s32 %s71, 1
    %p75 = scmp.eq.s32.totalorder %s16, 1
    %p76 = scmp.ne.s32.totalorder %s71, %s73
    %p77 = scmp.eq.s32.totalorder %s16, 0
    %p78 = por %p76, %p77
    %p79 = scmp.ne.s32.totalorder %s71, %s73
    %p80 = scmp.eq.s32.totalorder %s21, 1
    %p81 = por %p79, %p80
    %p82 = scmp.ne.s32.totalorder %s73, %s74
    %p83 = scmp.eq.s32.totalorder %s21, 0
    %p84 = por %p82, %p83
    %p85 = scmp.ne.s32.totalorder %s73, %s74
    %p86 = scmp.eq.s32.totalorder %s22, 1
    %p87 = por %p85, %p86
    %p89 = scmp.ne.s32.totalorder %s74, %s88
    %p90 = scmp.eq.s32.totalorder %s22, 0
    %p91 = por %p89, %p90
    %s93 = sadd.s32 %s92, 1
    %p96 = scmp.eq.s32.totalorder %s16, 1
    %p97 = scmp.ne.s32.totalorder %s92, %s94
    %p98 = scmp.eq.s32.totalorder %s16, 0
    %p99 = por %p97, %p98
    %p100 = scmp.ne.s32.totalorder %s92, %s94
    %p101 = scmp.eq.s32.totalorder %s21, 1
    %p102 = por %p100, %p101
    %p103 = scmp.ne.s32.totalorder %s94, %s95
    %p104 = scmp.eq.s32.totalorder %s21, 0
    %p105 = por %p103, %p104
    %p106 = scmp.ne.s32.totalorder %s94, %s95
    %p107 = scmp.eq.s32.totalorder %s22, 1
    %p108 = por %p106, %p107
    %p110 = scmp.ne.s32.totalorder %s95, %s109
    %p111 = scmp.eq.s32.totalorder %s22, 0
    %p112 = por %p110, %p111
    %s114 = sadd.s32 %s113, 1
    %p117 = scmp.eq.s32.totalorder %s16, 1
    %p118 = scmp.ne.s32.totalorder %s113, %s115
    %p119 = scmp.eq.s32.totalorder %s16, 0
    %p120 = por %p118, %p119
    %p121 = scmp.ne.s32.totalorder %s113, %s115
    %p122 = scmp.eq.s32.totalorder %s21, 1
    %p123 = por %p121, %p122
    %p124 = scmp.ne.s32.totalorder %s115, %s116
    %p125 = scmp.eq.s32.totalorder %s21, 0
    %p126 = por %p124, %p125
    %p127 = scmp.ne.s32.totalorder %s115, %s116
    %p128 = scmp.eq.s32.totalorder %s22, 1
    %p129 = por %p127, %p128
    %p131 = scmp.ne.s32.totalorder %s116, %s130
    %p132 = scmp.eq.s32.totalorder %s22, 0
    %p133 = por %p131, %p132
    %s135 = sadd.s32 %s134, 1
    %p138 = scmp.eq.s32.totalorder %s16, 1
    %p139 = scmp.ne.s32.totalorder %s134, %s136
    %p140 = scmp.eq.s32.totalorder %s16, 0
    %p141 = por %p139, %p140
    %p142 = scmp.ne.s32.totalorder %s134, %s136
    %p143 = scmp.eq.s32.totalorder %s21, 1
    %p144 = por %p142, %p143
    %p145 = scmp.ne.s32.totalorder %s136, %s137
    %p146 = scmp.eq.s32.totalorder %s21, 0
    %p147 = por %p145, %p146
    %p148 = scmp.ne.s32.totalorder %s136, %s137
    %p149 = scmp.eq.s32.totalorder %s22, 1
    %p150 = por %p148, %p149
    %p152 = scmp.ne.s32.totalorder %s137, %s151
    %p153 = scmp.eq.s32.totalorder %s22, 0
    %p154 = por %p152, %p153
    %s156 = sadd.s32 %s155, 1
    %p159 = scmp.eq.s32.totalorder %s16, 1
    %p160 = scmp.ne.s32.totalorder %s155, %s157
    %p161 = scmp.eq.s32.totalorder %s16, 0
    %p162 = por %p160, %p161
    %p163 = scmp.ne.s32.totalorder %s155, %s157
    %p164 = scmp.eq.s32.totalorder %s21, 1
    %p165 = por %p163, %p164
    %p166 = scmp.ne.s32.totalorder %s157, %s158
    %p167 = scmp.eq.s32.totalorder %s21, 0
    %p168 = por %p166, %p167
    %p169 = scmp.ne.s32.totalorder %s157, %s158
    %p170 = scmp.eq.s32.totalorder %s22, 1
    %p171 = por %p169, %p170
    %p173 = scmp.ne.s32.totalorder %s158, %s172
    %p174 = scmp.eq.s32.totalorder %s22, 0
    %p175 = por %p173, %p174
    %s177 = sadd.s32 %s176, 1
    %p180 = scmp.eq.s32.totalorder %s16, 1
    %p181 = scmp.ne.s32.totalorder %s176, %s178
    %p182 = scmp.eq.s32.totalorder %s16, 0
    %p183 = por %p181, %p182
    %p184 = scmp.ne.s32.totalorder %s176, %s178
    %p185 = scmp.eq.s32.totalorder %s21, 1
    %p186 = por %p184, %p185
    %p187 = scmp.ne.s32.totalorder %s178, %s179
    %p188 = scmp.eq.s32.totalorder %s21, 0
    %p189 = por %p187, %p188
    %p190 = scmp.ne.s32.totalorder %s178, %s179
    %p191 = scmp.eq.s32.totalorder %s22, 1
    %p192 = por %p190, %p191
    %p194 = scmp.ne.s32.totalorder %s179, %s193
    %p195 = scmp.eq.s32.totalorder %s22, 0
    %p196 = por %p194, %p195
    %s198 = sadd.s32 %s197, 1
    %p201 = scmp.eq.s32.totalorder %s16, 1
    %p202 = scmp.ne.s32.totalorder %s197, %s199
    %p203 = scmp.eq.s32.totalorder %s16, 0
    %p204 = por %p202, %p203
    %p205 = scmp.ne.s32.totalorder %s197, %s199
    %p206 = scmp.eq.s32.totalorder %s21, 1
    %p207 = por %p205, %p206
    %p208 = scmp.ne.s32.totalorder %s199, %s200
    %p209 = scmp.eq.s32.totalorder %s21, 0
    %p210 = por %p208, %p209
    %p211 = scmp.ne.s32.totalorder %s199, %s200
    %p212 = scmp.eq.s32.totalorder %s22, 1
    %p213 = por %p211, %p212
    %p215 = scmp.ne.s32.totalorder %s200, %s214
    %p216 = scmp.eq.s32.totalorder %s22, 0
    %p217 = por %p215, %p216
    %s219 = sadd.s32 %s218, 1
    %p222 = scmp.eq.s32.totalorder %s16, 1
    %p223 = scmp.ne.s32.totalorder %s218, %s220
    %p224 = scmp.eq.s32.totalorder %s16, 0
    %p225 = por %p223, %p224
    %p226 = scmp.ne.s32.totalorder %s218, %s220
    %p227 = scmp.eq.s32.totalorder %s21, 1
    %p228 = por %p226, %p227
    %p229 = scmp.ne.s32.totalorder %s220, %s221
    %p230 = scmp.eq.s32.totalorder %s21, 0
    %p231 = por %p229, %p230
    %p232 = scmp.ne.s32.totalorder %s220, %s221
    %p233 = scmp.eq.s32.totalorder %s22, 1
    %p234 = por %p232, %p233
    %p236 = scmp.ne.s32.totalorder %s221, %s235
    %p237 = scmp.eq.s32.totalorder %s22, 0
    %p238 = por %p236, %p237
    %s239 = ssub.s32 %s16, %s23
    %p240 = scmp.eq.s32.totalorder %s239, 0
    %s242 = sadd.s32 %s241, 1
    %s243 = scalar_select %p240, %s241, %s242
    %p246 = pneg %p240
    %p247 = scmp.eq.s32.totalorder %s16, 1
    %p248 = por %p246, %p247
    %p249 = scmp.ne.s32.totalorder %s241, %s244
    %p250 = scmp.eq.s32.totalorder %s16, 0
    %p251 = por %p249, %p250
    %p252 = scmp.ne.s32.totalorder %s241, %s244
    %p253 = scmp.eq.s32.totalorder %s21, 1
    %p254 = por %p252, %p253
    %p255 = scmp.ne.s32.totalorder %s244, %s245
    %p256 = scmp.eq.s32.totalorder %s21, 0
    %p257 = por %p255, %p256
    %p258 = scmp.ne.s32.totalorder %s244, %s245
    %p259 = scmp.eq.s32.totalorder %s22, 1
    %p260 = por %p258, %p259
    %p262 = scmp.ne.s32.totalorder %s245, %s261
    %p263 = scmp.eq.s32.totalorder %s22, 0
    %p264 = por %p262, %p263
    %p265 = scmp.le.s32.totalorder 1, %s16
    %p266 = scmp.lt.s32.totalorder %s16, 3
    %p267 = pnand %p265, %p266
    %p268 = pneg %p267
    // Predicated region
    $region9: #{unet_block_encode_bottleneck.1} parent=5 // pred_check
      _
    $region10: #{unet_block_encode_bottleneck.1} parent=5 // pred_check_branch
      %270 = sbr.rel (%p267) target = $region12
    $region11: #{unet_block_encode_bottleneck.1} parent=5 // pred_region
      %s271 = ssub.s32 %s16, 1
      // Predicated region
      $region13: #{unet_block_encode_bottleneck.1} parent=11 // pred_check
        %p272 = pneg %p63
      $region14: #{unet_block_encode_bottleneck.1} parent=11 // pred_check_branch
        %274 = sbr.rel (%p272) target = $region16
      $region15: #{unet_block_encode_bottleneck.1} parent=11 // pred_region
        _
      $region16: #{unet_block_encode_bottleneck.1} parent=11 // pred_fallthru
        _
      // Predicated region
      $region17: #{unet_block_encode_bottleneck.1} parent=11 // pred_check
        %p275 = pneg %p84
      $region18: #{unet_block_encode_bottleneck.1} parent=11 // pred_check_branch
        %277 = sbr.rel (%p275) target = $region20
      $region19: #{unet_block_encode_bottleneck.1} parent=11 // pred_region
        _
      $region20: #{unet_block_encode_bottleneck.1} parent=11 // pred_fallthru
        _
      // Predicated region
      $region21: #{unet_block_encode_bottleneck.1} parent=11 // pred_check
        %p278 = pneg %p105
      $region22: #{unet_block_encode_bottleneck.1} parent=11 // pred_check_branch
        %280 = sbr.rel (%p278) target = $region24
      $region23: #{unet_block_encode_bottleneck.1} parent=11 // pred_region
        _
      $region24: #{unet_block_encode_bottleneck.1} parent=11 // pred_fallthru
        _
      // Predicated region
      $region25: #{unet_block_encode_bottleneck.1} parent=11 // pred_check
        %p281 = pneg %p126
      $region26: #{unet_block_encode_bottleneck.1} parent=11 // pred_check_branch
        %283 = sbr.rel (%p281) target = $region28
      $region27: #{unet_block_encode_bottleneck.1} parent=11 // pred_region
        _
      $region28: #{unet_block_encode_bottleneck.1} parent=11 // pred_fallthru
        _
      // Predicated region
      $region29: #{unet_block_encode_bottleneck.1} parent=11 // pred_check
        %p284 = pneg %p147
      $region30: #{unet_block_encode_bottleneck.1} parent=11 // pred_check_branch
        %286 = sbr.rel (%p284) target = $region32
      $region31: #{unet_block_encode_bottleneck.1} parent=11 // pred_region
        _
      $region32: #{unet_block_encode_bottleneck.1} parent=11 // pred_fallthru
        _
      // Predicated region
      $region33: #{unet_block_encode_bottleneck.1} parent=11 // pred_check
        %p287 = pneg %p168
      $region34: #{unet_block_encode_bottleneck.1} parent=11 // pred_check_branch
        %289 = sbr.rel (%p287) target = $region36
      $region35: #{unet_block_encode_bottleneck.1} parent=11 // pred_region
        _
      $region36: #{unet_block_encode_bottleneck.1} parent=11 // pred_fallthru
        _
      // Predicated region
      $region37: #{unet_block_encode_bottleneck.1} parent=11 // pred_check
        %p290 = pneg %p189
      $region38: #{unet_block_encode_bottleneck.1} parent=11 // pred_check_branch
        %292 = sbr.rel (%p290) target = $region40
      $region39: #{unet_block_encode_bottleneck.1} parent=11 // pred_region
        _
      $region40: #{unet_block_encode_bottleneck.1} parent=11 // pred_fallthru
        _
      // Predicated region
      $region41: #{unet_block_encode_bottleneck.1} parent=11 // pred_check
        %p293 = pneg %p210
      $region42: #{unet_block_encode_bottleneck.1} parent=11 // pred_check_branch
        %295 = sbr.rel (%p293) target = $region44
      $region43: #{unet_block_encode_bottleneck.1} parent=11 // pred_region
        _
      $region44: #{unet_block_encode_bottleneck.1} parent=11 // pred_fallthru
        _
      // Predicated region
      $region45: #{unet_block_encode_bottleneck.1} parent=11 // pred_check
        %p296 = pneg %p231
      $region46: #{unet_block_encode_bottleneck.1} parent=11 // pred_check_branch
        %298 = sbr.rel (%p296) target = $region48
      $region47: #{unet_block_encode_bottleneck.1} parent=11 // pred_region
        _
      $region48: #{unet_block_encode_bottleneck.1} parent=11 // pred_fallthru
        _
    $region12: #{unet_block_encode_bottleneck.1} parent=5 // pred_fallthru
      _
    %p299 = scmp.lt.s32.totalorder %s16, 2
    // Predicated region
    $region49: #{unet_block_encode_bottleneck.1} parent=5 // pred_check
      %p300 = pneg %p299
    $region50: #{unet_block_encode_bottleneck.1} parent=5 // pred_check_branch
      %302 = sbr.rel (%p300) target = $region52
    $region51: #{unet_block_encode_bottleneck.1} parent=5 // pred_region
      // Predicated region
      $region53: #{unet_block_encode_bottleneck.1} parent=51 // pred_check
        %p303 = pneg %p36
      $region54: #{unet_block_encode_bottleneck.1} parent=51 // pred_check_branch
        %305 = sbr.rel (%p303) target = $region56
      $region55: #{unet_block_encode_bottleneck.1} parent=51 // pred_region
        %p306 = scmp.lt.s32.totalorder %s16, 1
        %s307 = scalar_select %p306, %s16, 1
        %s308 = smul.addr %s307, 4
        %s309 = smul.addr %s308, 8
        %s310 = scalar_lea.vmem %s0, %s309
      $region56: #{unet_block_encode_bottleneck.1} parent=51 // pred_fallthru
        _
    $region52: #{unet_block_encode_bottleneck.1} parent=5 // pred_fallthru
      _
    %p311 = scmp.le.s32.totalorder 1, %s16
    %p312 = scmp.lt.s32.totalorder %s16, 3
    %p313 = pnand %p311, %p312
    %p314 = pneg %p313
    // Predicated region
    $region57: #{unet_block_encode_bottleneck.1} parent=5 // pred_check
      _
    $region58: #{unet_block_encode_bottleneck.1} parent=5 // pred_check_branch
      %316 = sbr.rel (%p313) target = $region60
    $region59: #{unet_block_encode_bottleneck.1} parent=5 // pred_region
      %s317 = ssub.s32 %s16, 1
      %p318 = scmp.lt.s32.totalorder %s21, 1
      %s319 = scalar_select %p318, %s21, 1
      %s320 = smul.addr %s319, 4
      %s321 = smul.addr %s320, 8
      %s322 = scalar_lea.vmem %s0, %s321
      %p323 = pneg %p42
      %p324 = pneg %p39
      %p325 = pneg %p63
      %p326 = pneg %p60
      %p327 = pneg %p84
      %p328 = pneg %p81
      %p329 = pneg %p105
      %p330 = pneg %p102
      %p331 = pneg %p126
      %p332 = pneg %p123
      %p333 = pneg %p147
      %p334 = pneg %p144
      %p335 = pneg %p168
      %p336 = pneg %p165
      %p337 = pneg %p189
      %p338 = pneg %p186
      %p339 = pneg %p210
      %p340 = pneg %p207
      %p341 = pneg %p231
      %p342 = pneg %p228
      %p343 = pneg %p257
      %p344 = pneg %p254
      %p345 = scmp.lt.s32.totalorder %s21, 1
      %s346 = scalar_select %p345, %s21, 1
      %s347 = smul.addr %s346, 4
      %s348 = smul.addr %s347, 8
      %s349 = scalar_lea.vmem %s10, %s348
      %p350 = scmp.lt.s32.totalorder %s21, 1
      %s351 = scalar_select %p350, %s21, 1
      %s352 = smul.addr %s351, 4
      %s353 = smul.addr %s352, 8
      %s354 = scalar_lea.vmem %s0, %s353
      %p355 = scmp.lt.s32.totalorder %s21, 1
      %s356 = scalar_select %p355, %s21, 1
      %s357 = smul.addr %s356, 4
      %s358 = smul.addr %s357, 8
      %s359 = scalar_lea.vmem %s10, %s358
      %v360 = vld [vmem:[%s354] sm:$0xff]
      %v361 = vld [vmem:[%s354 + $0x8] sm:$0xff]
      %v362 = vld [vmem:[%s354 + $0x10] sm:$0xff]
      %v363 = vld [vmem:[%s354 + $0x18] sm:$0xff]
      %v364 = vld [vmem:[%s1] sm:$0xff]
      %v365 = vld [vmem:[%s1 + $0x8] sm:$0xff]
      %v366 = vld [vmem:[%s1 + $0x10] sm:$0xff]
      %v367 = vld [vmem:[%s1 + $0x18] sm:$0xff]
      %v368 = vld [vmem:[%s1 + $0x20] sm:$0xff]
      %v369 = vld [vmem:[%s1 + $0x28] sm:$0xff]
      %v370 = vld [vmem:[%s1 + $0x30] sm:$0xff]
      %v371 = vld [vmem:[%s1 + $0x38] sm:$0xff]
      %v372 = vld [vmem:[%s1 + $0x40] sm:$0xff]
      %vm373 = vcmask 588800
      %v375 = vsel %vm373, %v360, 0
      %v378 = vsel %vm373, %v361, 0
      %v381 = vsel %vm373, %v362, 0
      %v384 = vsel %vm373, %v363, 0
      %386 = vmatprep.subr.mxu0 0.0
      %v387 = vand.u32 %v364, 4294901760
      %388 = vmatpush1.msra.mxu0 %v387
      %389 = vmatprep.subr.mxu0 0.0
      %v390 = vand.u32 %v365, 4294901760
      %391 = vmatpush1.msra.mxu0 %v390
      %392 = vmatprep.subr.mxu0 0.0
      %v393 = vand.u32 %v366, 4294901760
      %394 = vmatpush1.msra.mxu0 %v393
      %395 = vmatprep.subr.mxu0 0.0
      %v396 = vand.u32 %v367, 4294901760
      %397 = vmatpush1.msra.mxu0 %v396
      %398 = vmatprep.subr.mxu0 0.0
      %v399 = vand.u32 %v368, 4294901760
      %400 = vmatpush1.msra.mxu0 %v399
      %401 = vmatprep.subr.mxu0 0.0
      %v402 = vand.u32 %v369, 4294901760
      %403 = vmatpush1.msra.mxu0 %v402
      %404 = vmatprep.subr.mxu0 0.0
      %v405 = vand.u32 %v370, 4294901760
      %406 = vmatpush1.msra.mxu0 %v405
      %407 = vmatprep.subr.mxu0 0.0
      %v408 = vand.u32 %v371, 4294901760
      %409 = vmatpush1.msra.mxu0 %v408
      %410 = vmatprep.subr.mxu0 0.0
      %v411 = vand.u32 %v372, 4294901760
      %412 = vmatpush1.msra.mxu0 %v411
      %413 = vmatprep.subr.mxu0 0.0
      %414 = vmatpush1.msra.mxu0 0.0
      %415 = vmatprep.subr.mxu0 0.0
      %416 = vmatpush1.msra.mxu0 0.0
      %417 = vmatprep.subr.mxu0 0.0
      %418 = vmatpush1.msra.mxu0 0.0
      %419 = vmatprep.subr.mxu0 0.0
      %420 = vmatpush1.msra.mxu0 0.0
      %421 = vmatprep.subr.mxu0 0.0
      %422 = vmatpush1.msra.mxu0 0.0
      %423 = vmatprep.subr.mxu0 0.0
      %424 = vmatpush1.msra.mxu0 0.0
      %425 = vmatprep.subr.mxu0 0.0
      %426 = vmatpush1.msra.mxu0 0.0
      %427 = vmatprep.subr.mxu0 0.0
      %428 = vmatpush1.msra.mxu0 0.0
      %429 = vmatprep.subr.mxu0 0.0
      %430 = vmatpush1.msra.mxu0 0.0
      %431 = vmatprep.subr.mxu0 0.0
      %432 = vmatpush1.msra.mxu0 0.0
      %433 = vmatprep.subr.mxu0 0.0
      %434 = vmatpush1.msra.mxu0 0.0
      %435 = vmatprep.subr.mxu0 0.0
      %436 = vmatpush1.msra.mxu0 0.0
      %437 = vmatprep.subr.mxu0 0.0
      %438 = vmatpush1.msra.mxu0 0.0
      %439 = vmatprep.subr.mxu0 0.0
      %440 = vmatpush1.msra.mxu0 0.0
      %441 = vmatprep.subr.mxu0 0.0
      %442 = vmatpush1.msra.mxu0 0.0
      %443 = vmatprep.subr.mxu0 0.0
      %444 = vmatpush1.msra.mxu0 0.0
      %445 = vmatprep.subr.mxu0 0.0
      %446 = vmatpush1.msra.mxu0 0.0
      %447 = vmatprep.subr.mxu0 0.0
      %448 = vmatpush1.msra.mxu0 0.0
      %449 = vmatprep.subr.mxu0 0.0
      %450 = vmatpush1.msra.mxu0 0.0
      %451 = vmatprep.subr.mxu0 0.0
      %452 = vmatpush1.msra.mxu0 0.0
      %453 = vmatprep.subr.mxu0 0.0
      %454 = vmatpush1.msra.mxu0 0.0
      %455 = vmatprep.subr.mxu0 0.0
      %456 = vmatpush1.msra.mxu0 0.0
      %457 = vmatprep.subr.mxu0 0.0
      %458 = vmatpush1.msra.mxu0 0.0
      %459 = vmatprep.mubr.f32.mxu0 0.0
      %v460 = vand.u32 %v375, 4294901760
      %v461 = vsub.f32 %v375, %v460
      %v462 = vand.u32 %v461, 4294901760
      %v463 = vsub.f32 %v461, %v462
      %v464 = vand.u32 %v463, 4294901760
      %465 = vmatmul.mubr.f32.gmra.mrb[0].mxu0 %v464
      %v466 = vpop.f32.mrb[0].mxu0
      %v467 = vadd.f32 0.0, %v466
      %v468 = vpop.f32.mrb[0].mxu0
      %469 = vmatprep.mubr.f32.mxu0 0.0
      %v470 = vand.u32 %v378, 4294901760
      %v471 = vsub.f32 %v378, %v470
      %v472 = vand.u32 %v471, 4294901760
      %v473 = vsub.f32 %v471, %v472
      %v474 = vand.u32 %v473, 4294901760
      %475 = vmatmul.mubr.f32.gmra.mrb[0].mxu0 %v474
      %v476 = vpop.f32.mrb[0].mxu0
      %v477 = vadd.f32 0.0, %v476
      %v478 = vpop.f32.mrb[0].mxu0
      %479 = vmatprep.mubr.f32.mxu0 0.0
      %v480 = vand.u32 %v381, 4294901760
      %v481 = vsub.f32 %v381, %v480
      %v482 = vand.u32 %v481, 4294901760
      %v483 = vsub.f32 %v481, %v482
      %v484 = vand.u32 %v483, 4294901760
      %485 = vmatmul.mubr.f32.gmra.mrb[0].mxu0 %v484
      %v486 = vpop.f32.mrb[0].mxu0
      %v487 = vadd.f32 0.0, %v486
      %v488 = vpop.f32.mrb[0].mxu0
      %489 = vmatprep.mubr.f32.mxu0 0.0
      %v490 = vand.u32 %v384, 4294901760
      %v491 = vsub.f32 %v384, %v490
      %v492 = vand.u32 %v491, 4294901760
      %v493 = vsub.f32 %v491, %v492
      %v494 = vand.u32 %v493, 4294901760
      %495 = vmatmul.mubr.f32.gmra.mrb[0].mxu0 %v494
      %v496 = vpop.f32.mrb[0].mxu0
      %v497 = vadd.f32 0.0, %v496
      %v498 = vpop.f32.mrb[0].mxu0
      %499 = vdwg.mxu0
      %500 = vmatprep.subr.mxu0 0.0
      %v501 = vand.u32 %v364, 4294901760
      %v502 = vsub.f32 %v364, %v501
      %v503 = vand.u32 %v502, 4294901760
      %v504 = vsub.f32 %v502, %v503
      %v505 = vand.u32 %v504, 4294901760
      %506 = vmatpush1.msra.mxu0 %v505
      %507 = vmatprep.subr.mxu0 0.0
      %v508 = vand.u32 %v365, 4294901760
      %v509 = vsub.f32 %v365, %v508
      %v510 = vand.u32 %v509, 4294901760
      %v511 = vsub.f32 %v509, %v510
      %v512 = vand.u32 %v511, 4294901760
      %513 = vmatpush1.msra.mxu0 %v512
      %514 = vmatprep.subr.mxu0 0.0
      %v515 = vand.u32 %v366, 4294901760
      %v516 = vsub.f32 %v366, %v515
      %v517 = vand.u32 %v516, 4294901760
      %v518 = vsub.f32 %v516, %v517
      %v519 = vand.u32 %v518, 4294901760
      %520 = vmatpush1.msra.mxu0 %v519
      %521 = vmatprep.subr.mxu0 0.0
      %v522 = vand.u32 %v367, 4294901760
      %v523 = vsub.f32 %v367, %v522
      %v524 = vand.u32 %v523, 4294901760
      %v525 = vsub.f32 %v523, %v524
      %v526 = vand.u32 %v525, 4294901760
      %527 = vmatpush1.msra.mxu0 %v526
      %528 = vmatprep.subr.mxu0 0.0
      %v529 = vand.u32 %v368, 4294901760
      %v530 = vsub.f32 %v368, %v529
      %v531 = vand.u32 %v530, 4294901760
      %v532 = vsub.f32 %v530, %v531
      %v533 = vand.u32 %v532, 4294901760
      %534 = vmatpush1.msra.mxu0 %v533
      %535 = vmatprep.subr.mxu0 0.0
      %v536 = vand.u32 %v369, 4294901760
      %v537 = vsub.f32 %v369, %v536
      %v538 = vand.u32 %v537, 4294901760
      %v539 = vsub.f32 %v537, %v538
      %v540 = vand.u32 %v539, 4294901760
      %541 = vmatpush1.msra.mxu0 %v540
      %542 = vmatprep.subr.mxu0 0.0
      %v543 = vand.u32 %v370, 4294901760
      %v544 = vsub.f32 %v370, %v543
      %v545 = vand.u32 %v544, 4294901760
      %v546 = vsub.f32 %v544, %v545
      %v547 = vand.u32 %v546, 4294901760
      %548 = vmatpush1.msra.mxu0 %v547
      %549 = vmatprep.subr.mxu0 0.0
      %v550 = vand.u32 %v371, 4294901760
      %v551 = vsub.f32 %v371, %v550
      %v552 = vand.u32 %v551, 4294901760
      %v553 = vsub.f32 %v551, %v552
      %v554 = vand.u32 %v553, 4294901760
      %555 = vmatpush1.msra.mxu0 %v554
      %556 = vmatprep.subr.mxu0 0.0
      %v557 = vand.u32 %v372, 4294901760
      %v558 = vsub.f32 %v372, %v557
      %v559 = vand.u32 %v558, 4294901760
      %v560 = vsub.f32 %v558, %v559
      %v561 = vand.u32 %v560, 4294901760
      %562 = vmatpush1.msra.mxu0 %v561
      %563 = vmatprep.subr.mxu0 0.0
      %564 = vmatpush1.msra.mxu0 0.0
      %565 = vmatprep.subr.mxu0 0.0
      %566 = vmatpush1.msra.mxu0 0.0
      %567 = vmatprep.subr.mxu0 0.0
      %568 = vmatpush1.msra.mxu0 0.0
      %569 = vmatprep.subr.mxu0 0.0
      %570 = vmatpush1.msra.mxu0 0.0
      %571 = vmatprep.subr.mxu0 0.0
      %572 = vmatpush1.msra.mxu0 0.0
      %573 = vmatprep.subr.mxu0 0.0
      %574 = vmatpush1.msra.mxu0 0.0
      %575 = vmatprep.subr.mxu0 0.0
      %576 = vmatpush1.msra.mxu0 0.0
      %577 = vmatprep.subr.mxu0 0.0
      %578 = vmatpush1.msra.mxu0 0.0
      %579 = vmatprep.subr.mxu0 0.0
      %580 = vmatpush1.msra.mxu0 0.0
      %581 = vmatprep.subr.mxu0 0.0
      %582 = vmatpush1.msra.mxu0 0.0
      %583 = vmatprep.subr.mxu0 0.0
      %584 = vmatpush1.msra.mxu0 0.0
      %585 = vmatprep.subr.mxu0 0.0
      %586 = vmatpush1.msra.mxu0 0.0
      %587 = vmatprep.subr.mxu0 0.0
      %588 = vmatpush1.msra.mxu0 0.0
      %589 = vmatprep.subr.mxu0 0.0
      %590 = vmatpush1.msra.mxu0 0.0
      %591 = vmatprep.subr.mxu0 0.0
      %592 = vmatpush1.msra.mxu0 0.0
      %593 = vmatprep.subr.mxu0 0.0
      %594 = vmatpush1.msra.mxu0 0.0
      %595 = vmatprep.subr.mxu0 0.0
      %596 = vmatpush1.msra.mxu0 0.0
      %597 = vmatprep.subr.mxu0 0.0
      %598 = vmatpush1.msra.mxu0 0.0
      %599 = vmatprep.subr.mxu0 0.0
      %600 = vmatpush1.msra.mxu0 0.0
      %601 = vmatprep.subr.mxu0 0.0
      %602 = vmatpush1.msra.mxu0 0.0
      %603 = vmatprep.subr.mxu0 0.0
      %604 = vmatpush1.msra.mxu0 0.0
      %605 = vmatprep.subr.mxu0 0.0
      %606 = vmatpush1.msra.mxu0 0.0
      %607 = vmatprep.subr.mxu0 0.0
      %608 = vmatpush1.msra.mxu0 0.0
      %609 = vmatprep.mubr.f32.mxu0 0.0
      %v610 = vand.u32 %v375, 4294901760
      %611 = vmatmul.mubr.f32.gmra.mrb[0].mxu0 %v610
      %v612 = vpop.f32.mrb[0].mxu0
      %v613 = vadd.f32 %v467, %v612
      %v614 = vpop.f32.mrb[0].mxu0
      %615 = vmatprep.mubr.f32.mxu0 0.0
      %v616 = vand.u32 %v378, 4294901760
      %617 = vmatmul.mubr.f32.gmra.mrb[0].mxu0 %v616
      %v618 = vpop.f32.mrb[0].mxu0
      %v619 = vadd.f32 %v477, %v618
      %v620 = vpop.f32.mrb[0].mxu0
      %621 = vmatprep.mubr.f32.mxu0 0.0
      %v622 = vand.u32 %v381, 4294901760
      %623 = vmatmul.mubr.f32.gmra.mrb[0].mxu0 %v622
      %v624 = vpop.f32.mrb[0].mxu0
      %v625 = vadd.f32 %v487, %v624
      %v626 = vpop.f32.mrb[0].mxu0
      %627 = vmatprep.mubr.f32.mxu0 0.0
      %v628 = vand.u32 %v384, 4294901760
      %629 = vmatmul.mubr.f32.gmra.mrb[0].mxu0 %v628
      %v630 = vpop.f32.mrb[0].mxu0
      %v631 = vadd.f32 %v497, %v630
      %v632 = vpop.f32.mrb[0].mxu0
      %633 = vdwg.mxu0
      %634 = vmatprep.subr.mxu0 0.0
      %v635 = vand.u32 %v364, 4294901760
      %v636 = vsub.f32 %v364, %v635
      %637 = vmatpush1.msra.mxu0 %v636
      %638 = vmatprep.subr.mxu0 0.0
      %v639 = vand.u32 %v365, 4294901760
      %v640 = vsub.f32 %v365, %v639
      %641 = vmatpush1.msra.mxu0 %v640
      %642 = vmatprep.subr.mxu0 0.0
      %v643 = vand.u32 %v366, 4294901760
      %v644 = vsub.f32 %v366, %v643
      %645 = vmatpush1.msra.mxu0 %v644
      %646 = vmatprep.subr.mxu0 0.0
      %v647 = vand.u32 %v367, 4294901760
      %v648 = vsub.f32 %v367, %v647
      %649 = vmatpush1.msra.mxu0 %v648
      %650 = vmatprep.subr.mxu0 0.0
      %v651 = vand.u32 %v368, 4294901760
      %v652 = vsub.f32 %v368, %v651
      %653 = vmatpush1.msra.mxu0 %v652
      %654 = vmatprep.subr.mxu0 0.0
      %v655 = vand.u32 %v369, 4294901760
      %v656 = vsub.f32 %v369, %v655
      %657 = vmatpush1.msra.mxu0 %v656
      %658 = vmatprep.subr.mxu0 0.0
      %v659 = vand.u32 %v370, 4294901760
      %v660 = vsub.f32 %v370, %v659
      %661 = vmatpush1.msra.mxu0 %v660
      %662 = vmatprep.subr.mxu0 0.0
      %v663 = vand.u32 %v371, 4294901760
      %v664 = vsub.f32 %v371, %v663
      %665 = vmatpush1.msra.mxu0 %v664
      %666 = vmatprep.subr.mxu0 0.0
      %v667 = vand.u32 %v372, 4294901760
      %v668 = vsub.f32 %v372, %v667
      %669 = vmatpush1.msra.mxu0 %v668
      %670 = vmatprep.subr.mxu0 0.0
      %671 = vmatpush1.msra.mxu0 0.0
      %672 = vmatprep.subr.mxu0 0.0
      %673 = vmatpush1.msra.mxu0 0.0
      %674 = vmatprep.subr.mxu0 0.0
      %675 = vmatpush1.msra.mxu0 0.0
      %676 = vmatprep.subr.mxu0 0.0
      %677 = vmatpush1.msra.mxu0 0.0
      %678 = vmatprep.subr.mxu0 0.0
      %679 = vmatpush1.msra.mxu0 0.0
      %680 = vmatprep.subr.mxu0 0.0
      %681 = vmatpush1.msra.mxu0 0.0
      %682 = vmatprep.subr.mxu0 0.0
      %683 = vmatpush1.msra.mxu0 0.0
      %684 = vmatprep.subr.mxu0 0.0
      %685 = vmatpush1.msra.mxu0 0.0
      %686 = vmatprep.subr.mxu0 0.0
      %687 = vmatpush1.msra.mxu0 0.0
      %688 = vmatprep.subr.mxu0 0.0
      %689 = vmatpush1.msra.mxu0 0.0
      %690 = vmatprep.subr.mxu0 0.0
      %691 = vmatpush1.msra.mxu0 0.0
      %692 = vmatprep.subr.mxu0 0.0
      %693 = vmatpush1.msra.mxu0 0.0
      %694 = vmatprep.subr.mxu0 0.0
      %695 = vmatpush1.msra.mxu0 0.0
      %696 = vmatprep.subr.mxu0 0.0
      %697 = vmatpush1.msra.mxu0 0.0
      %698 = vmatprep.subr.mxu0 0.0
      %699 = vmatpush1.msra.mxu0 0.0
      %700 = vmatprep.subr.mxu0 0.0
      %701 = vmatpush1.msra.mxu0 0.0
      %702 = vmatprep.subr.mxu0 0.0
      %703 = vmatpush1.msra.mxu0 0.0
      %704 = vmatprep.subr.mxu0 0.0
      %705 = vmatpush1.msra.mxu0 0.0
      %706 = vmatprep.subr.mxu0 0.0
      %707 = vmatpush1.msra.mxu0 0.0
      %708 = vmatprep.subr.mxu0 0.0
      %709 = vmatpush1.msra.mxu0 0.0
      %710 = vmatprep.subr.mxu0 0.0
      %711 = vmatpush1.msra.mxu0 0.0
      %712 = vmatprep.subr.mxu0 0.0
      %713 = vmatpush1.msra.mxu0 0.0
      %714 = vmatprep.subr.mxu0 0.0
      %715 = vmatpush1.msra.mxu0 0.0
      %716 = vmatprep.mubr.f32.mxu0 0.0
      %v717 = vand.u32 %v375, 4294901760
      %v718 = vsub.f32 %v375, %v717
      %719 = vmatmul.mubr.f32.gmra.mrb[0].mxu0 %v718
      %v720 = vpop.f32.mrb[0].mxu0
      %v721 = vadd.f32 %v613, %v720
      %v722 = vpop.f32.mrb[0].mxu0
      %723 = vmatprep.mubr.f32.mxu0 0.0
      %v724 = vand.u32 %v378, 4294901760
      %v725 = vsub.f32 %v378, %v724
      %726 = vmatmul.mubr.f32.gmra.mrb[0].mxu0 %v725
      %v727 = vpop.f32.mrb[0].mxu0
      %v728 = vadd.f32 %v619, %v727
      %v729 = vpop.f32.mrb[0].mxu0
      %730 = vmatprep.mubr.f32.mxu0 0.0
      %v731 = vand.u32 %v381, 4294901760
      %v732 = vsub.f32 %v381, %v731
      %733 = vmatmul.mubr.f32.gmra.mrb[0].mxu0 %v732
      %v734 = vpop.f32.mrb[0].mxu0
      %v735 = vadd.f32 %v625, %v734
      %v736 = vpop.f32.mrb[0].mxu0
      %737 = vmatprep.mubr.f32.mxu0 0.0
      %v738 = vand.u32 %v384, 4294901760
      %v739 = vsub.f32 %v384, %v738
      %740 = vmatmul.mubr.f32.gmra.mrb[0].mxu0 %v739
      %v741 = vpop.f32.mrb[0].mxu0
      %v742 = vadd.f32 %v631, %v741
      %v743 = vpop.f32.mrb[0].mxu0
      %744 = vdwg.mxu0
      %745 = vmatprep.subr.mxu0 0.0
      %v746 = vand.u32 %v364, 4294901760
      %747 = vmatpush1.msra.mxu0 %v746
      %748 = vmatprep.subr.mxu0 0.0
      %v749 = vand.u32 %v365, 4294901760
      %750 = vmatpush1.msra.mxu0 %v749
      %751 = vmatprep.subr.mxu0 0.0
      %v752 = vand.u32 %v366, 4294901760
      %753 = vmatpush1.msra.mxu0 %v752
      %754 = vmatprep.subr.mxu0 0.0
      %v755 = vand.u32 %v367, 4294901760
      %756 = vmatpush1.msra.mxu0 %v755
      %757 = vmatprep.subr.mxu0 0.0
      %v758 = vand.u32 %v368, 4294901760
      %759 = vmatpush1.msra.mxu0 %v758
      %760 = vmatprep.subr.mxu0 0.0
      %v761 = vand.u32 %v369, 4294901760
      %762 = vmatpush1.msra.mxu0 %v761
      %763 = vmatprep.subr.mxu0 0.0
      %v764 = vand.u32 %v370, 4294901760
      %765 = vmatpush1.msra.mxu0 %v764
      %766 = vmatprep.subr.mxu0 0.0
      %v767 = vand.u32 %v371, 4294901760
      %768 = vmatpush1.msra.mxu0 %v767
      %769 = vmatprep.subr.mxu0 0.0
      %v770 = vand.u32 %v372, 4294901760
      %771 = vmatpush1.msra.mxu0 %v770
      %772 = vmatprep.subr.mxu0 0.0
      %773 = vmatpush1.msra.mxu0 0.0
      %774 = vmatprep.subr.mxu0 0.0
      %775 = vmatpush1.msra.mxu0 0.0
      %776 = vmatprep.subr.mxu0 0.0
      %777 = vmatpush1.msra.mxu0 0.0
      %778 = vmatprep.subr.mxu0 0.0
      %779 = vmatpush1.msra.mxu0 0.0
      %780 = vmatprep.subr.mxu0 0.0
      %781 = vmatpush1.msra.mxu0 0.0
      %782 = vmatprep.subr.mxu0 0.0
      %783 = vmatpush1.msra.mxu0 0.0
      %784 = vmatprep.subr.mxu0 0.0
      %785 = vmatpush1.msra.mxu0 0.0
      %786 = vmatprep.subr.mxu0 0.0
      %787 = vmatpush1.msra.mxu0 0.0
      %788 = vmatprep.subr.mxu0 0.0
      %789 = vmatpush1.msra.mxu0 0.0
      %790 = vmatprep.subr.mxu0 0.0
      %791 = vmatpush1.msra.mxu0 0.0
      %792 = vmatprep.subr.mxu0 0.0
      %793 = vmatpush1.msra.mxu0 0.0
      %794 = vmatprep.subr.mxu0 0.0
      %795 = vmatpush1.msra.mxu0 0.0
      %796 = vmatprep.subr.mxu0 0.0
      %797 = vmatpush1.msra.mxu0 0.0
      %798 = vmatprep.subr.mxu0 0.0
      %799 = vmatpush1.msra.mxu0 0.0
      %800 = vmatprep.subr.mxu0 0.0
      %801 = vmatpush1.msra.mxu0 0.0
      %802 = vmatprep.subr.mxu0 0.0
      %803 = vmatpush1.msra.mxu0 0.0
      %804 = vmatprep.subr.mxu0 0.0
      %805 = vmatpush1.msra.mxu0 0.0
      %806 = vmatprep.subr.mxu0 0.0
      %807 = vmatpush1.msra.mxu0 0.0
      %808 = vmatprep.subr.mxu0 0.0
      %809 = vmatpush1.msra.mxu0 0.0
      %810 = vmatprep.subr.mxu0 0.0
      %811 = vmatpush1.msra.mxu0 0.0
      %812 = vmatprep.subr.mxu0 0.0
      %813 = vmatpush1.msra.mxu0 0.0
      %814 = vmatprep.subr.mxu0 0.0
      %815 = vmatpush1.msra.mxu0 0.0
      %816 = vmatprep.subr.mxu0 0.0
      %817 = vmatpush1.msra.mxu0 0.0
      %818 = vmatprep.mubr.f32.mxu0 0.0
      %v819 = vand.u32 %v375, 4294901760
      %v820 = vsub.f32 %v375, %v819
      %v821 = vand.u32 %v820, 4294901760
      %822 = vmatmul.mubr.f32.gmra.mrb[0].mxu0 %v821
      %v823 = vpop.f32.mrb[0].mxu0
      %v824 = vadd.f32 %v721, %v823
      %v825 = vpop.f32.mrb[0].mxu0
      %826 = vmatprep.mubr.f32.mxu0 0.0
      %v827 = vand.u32 %v378, 4294901760
      %v828 = vsub.f32 %v378, %v827
      %v829 = vand.u32 %v828, 4294901760
      %830 = vmatmul.mubr.f32.gmra.mrb[0].mxu0 %v829
      %v831 = vpop.f32.mrb[0].mxu0
      %v832 = vadd.f32 %v728, %v831
      %v833 = vpop.f32.mrb[0].mxu0
      %834 = vmatprep.mubr.f32.mxu0 0.0
      %v835 = vand.u32 %v381, 4294901760
      %v836 = vsub.f32 %v381, %v835
      %v837 = vand.u32 %v836, 4294901760
      %838 = vmatmul.mubr.f32.gmra.mrb[0].mxu0 %v837
      %v839 = vpop.f32.mrb[0].mxu0
      %v840 = vadd.f32 %v735, %v839
      %v841 = vpop.f32.mrb[0].mxu0
      %842 = vmatprep.mubr.f32.mxu0 0.0
      %v843 = vand.u32 %v384, 4294901760
      %v844 = vsub.f32 %v384, %v843
      %v845 = vand.u32 %v844, 4294901760
      %846 = vmatmul.mubr.f32.gmra.mrb[0].mxu0 %v845
      %v847 = vpop.f32.mrb[0].mxu0
      %v848 = vadd.f32 %v742, %v847
      %v849 = vpop.f32.mrb[0].mxu0
      %850 = vdwg.mxu0
      %851 = vmatprep.subr.mxu0 0.0
      %v852 = vand.u32 %v364, 4294901760
      %v853 = vsub.f32 %v364, %v852
      %v854 = vand.u32 %v853, 4294901760
      %855 = vmatpush1.msra.mxu0 %v854
      %856 = vmatprep.subr.mxu0 0.0
      %v857 = vand.u32 %v365, 4294901760
      %v858 = vsub.f32 %v365, %v857
      %v859 = vand.u32 %v858, 4294901760
      %860 = vmatpush1.msra.mxu0 %v859
      %861 = vmatprep.subr.mxu0 0.0
      %v862 = vand.u32 %v366, 4294901760
      %v863 = vsub.f32 %v366, %v862
      %v864 = vand.u32 %v863, 4294901760
      %865 = vmatpush1.msra.mxu0 %v864
      %866 = vmatprep.subr.mxu0 0.0
      %v867 = vand.u32 %v367, 4294901760
      %v868 = vsub.f32 %v367, %v867
      %v869 = vand.u32 %v868, 4294901760
      %870 = vmatpush1.msra.mxu0 %v869
      %871 = vmatprep.subr.mxu0 0.0
      %v872 = vand.u32 %v368, 4294901760
      %v873 = vsub.f32 %v368, %v872
      %v874 = vand.u32 %v873, 4294901760
      %875 = vmatpush1.msra.mxu0 %v874
      %876 = vmatprep.subr.mxu0 0.0
      %v877 = vand.u32 %v369, 4294901760
      %v878 = vsub.f32 %v369, %v877
      %v879 = vand.u32 %v878, 4294901760
      %880 = vmatpush1.msra.mxu0 %v879
      %881 = vmatprep.subr.mxu0 0.0
      %v882 = vand.u32 %v370, 4294901760
      %v883 = vsub.f32 %v370, %v882
      %v884 = vand.u32 %v883, 4294901760
      %885 = vmatpush1.msra.mxu0 %v884
      %886 = vmatprep.subr.mxu0 0.0
      %v887 = vand.u32 %v371, 4294901760
      %v888 = vsub.f32 %v371, %v887
      %v889 = vand.u32 %v888, 4294901760
      %890 = vmatpush1.msra.mxu0 %v889
      %891 = vmatprep.subr.mxu0 0.0
      %v892 = vand.u32 %v372, 4294901760
      %v893 = vsub.f32 %v372, %v892
      %v894 = vand.u32 %v893, 4294901760
      %895 = vmatpush1.msra.mxu0 %v894
      %896 = vmatprep.subr.mxu0 0.0
      %897 = vmatpush1.msra.mxu0 0.0
      %898 = vmatprep.subr.mxu0 0.0
      %899 = vmatpush1.msra.mxu0 0.0
      %900 = vmatprep.subr.mxu0 0.0
      %901 = vmatpush1.msra.mxu0 0.0
      %902 = vmatprep.subr.mxu0 0.0
      %903 = vmatpush1.msra.mxu0 0.0
      %904 = vmatprep.subr.mxu0 0.0
      %905 = vmatpush1.msra.mxu0 0.0
      %906 = vmatprep.subr.mxu0 0.0
      %907 = vmatpush1.msra.mxu0 0.0
      %908 = vmatprep.subr.mxu0 0.0
      %909 = vmatpush1.msra.mxu0 0.0
      %910 = vmatprep.subr.mxu0 0.0
      %911 = vmatpush1.msra.mxu0 0.0
      %912 = vmatprep.subr.mxu0 0.0
      %913 = vmatpush1.msra.mxu0 0.0
      %914 = vmatprep.subr.mxu0 0.0
      %915 = vmatpush1.msra.mxu0 0.0
      %916 = vmatprep.subr.mxu0 0.0
      %917 = vmatpush1.msra.mxu0 0.0
      %918 = vmatprep.subr.mxu0 0.0
      %919 = vmatpush1.msra.mxu0 0.0
      %920 = vmatprep.subr.mxu0 0.0
      %921 = vmatpush1.msra.mxu0 0.0
      %922 = vmatprep.subr.mxu0 0.0
      %923 = vmatpush1.msra.mxu0 0.0
      %924 = vmatprep.subr.mxu0 0.0
      %925 = vmatpush1.msra.mxu0 0.0
      %926 = vmatprep.subr.mxu0 0.0
      %927 = vmatpush1.msra.mxu0 0.0
      %928 = vmatprep.subr.mxu0 0.0
      %929 = vmatpush1.msra.mxu0 0.0
      %930 = vmatprep.subr.mxu0 0.0
      %931 = vmatpush1.msra.mxu0 0.0
      %932 = vmatprep.subr.mxu0 0.0
      %933 = vmatpush1.msra.mxu0 0.0
      %934 = vmatprep.subr.mxu0 0.0
      %935 = vmatpush1.msra.mxu0 0.0
      %936 = vmatprep.subr.mxu0 0.0
      %937 = vmatpush1.msra.mxu0 0.0
      %938 = vmatprep.subr.mxu0 0.0
      %939 = vmatpush1.msra.mxu0 0.0
      %940 = vmatprep.subr.mxu0 0.0
      %941 = vmatpush1.msra.mxu0 0.0
      %942 = vmatprep.mubr.f32.mxu0 0.0
      %v943 = vand.u32 %v375, 4294901760
      %944 = vmatmul.mubr.f32.gmra.mrb[0].mxu0 %v943
      %v945 = vpop.f32.mrb[0].mxu0
      %v946 = vadd.f32 %v824, %v945
      %v947 = vpop.f32.mrb[0].mxu0
      %948 = vmatprep.mubr.f32.mxu0 0.0
      %v949 = vand.u32 %v378, 4294901760
      %950 = vmatmul.mubr.f32.gmra.mrb[0].mxu0 %v949
      %v951 = vpop.f32.mrb[0].mxu0
      %v952 = vadd.f32 %v832, %v951
      %v953 = vpop.f32.mrb[0].mxu0
      %954 = vmatprep.mubr.f32.mxu0 0.0
      %v955 = vand.u32 %v381, 4294901760
      %956 = vmatmul.mubr.f32.gmra.mrb[0].mxu0 %v955
      %v957 = vpop.f32.mrb[0].mxu0
      %v958 = vadd.f32 %v840, %v957
      %v959 = vpop.f32.mrb[0].mxu0
      %960 = vmatprep.mubr.f32.mxu0 0.0
      %v961 = vand.u32 %v384, 4294901760
      %962 = vmatmul.mubr.f32.gmra.mrb[0].mxu0 %v961
      %v963 = vpop.f32.mrb[0].mxu0
      %v964 = vadd.f32 %v848, %v963
      %v965 = vpop.f32.mrb[0].mxu0
      %966 = vdwg.mxu0
      %967 = vmatprep.subr.mxu0 0.0
      %v968 = vand.u32 %v364, 4294901760
      %969 = vmatpush1.msra.mxu0 %v968
      %970 = vmatprep.subr.mxu0 0.0
      %v971 = vand.u32 %v365, 4294901760
      %972 = vmatpush1.msra.mxu0 %v971
      %973 = vmatprep.subr.mxu0 0.0
      %v974 = vand.u32 %v366, 4294901760
      %975 = vmatpush1.msra.mxu0 %v974
      %976 = vmatprep.subr.mxu0 0.0
      %v977 = vand.u32 %v367, 4294901760
      %978 = vmatpush1.msra.mxu0 %v977
      %979 = vmatprep.subr.mxu0 0.0
      %v980 = vand.u32 %v368, 4294901760
      %981 = vmatpush1.msra.mxu0 %v980
      %982 = vmatprep.subr.mxu0 0.0
      %v983 = vand.u32 %v369, 4294901760
      %984 = vmatpush1.msra.mxu0 %v983
      %985 = vmatprep.subr.mxu0 0.0
      %v986 = vand.u32 %v370, 4294901760
      %987 = vmatpush1.msra.mxu0 %v986
      %988 = vmatprep.subr.mxu0 0.0
      %v989 = vand.u32 %v371, 4294901760
      %990 = vmatpush1.msra.mxu0 %v989
      %991 = vmatprep.subr.mxu0 0.0
      %v992 = vand.u32 %v372, 4294901760
      %993 = vmatpush1.msra.mxu0 %v992
      %994 = vmatprep.subr.mxu0 0.0
      %995 = vmatpush1.msra.mxu0 0.0
      %996 = vmatprep.subr.mxu0 0.0
      %997 = vmatpush1.msra.mxu0 0.0
      %998 = vmatprep.subr.mxu0 0.0
      %999 = vmatpush1.msra.mxu0 0.0
      %1000 = vmatprep.subr.mxu0 0.0
      %1001 = vmatpush1.msra.mxu0 0.0
      %1002 = vmatprep.subr.mxu0 0.0
      %1003 = vmatpush1.msra.mxu0 0.0
      %1004 = vmatprep.subr.mxu0 0.0
      %1005 = vmatpush1.msra.mxu0 0.0
      %1006 = vmatprep.subr.mxu0 0.0
      %1007 = vmatpush1.msra.mxu0 0.0
      %1008 = vmatprep.subr.mxu0 0.0
      %1009 = vmatpush1.msra.mxu0 0.0
      %1010 = vmatprep.subr.mxu0 0.0
      %1011 = vmatpush1.msra.mxu0 0.0
      %1012 = vmatprep.subr.mxu0 0.0
      %1013 = vmatpush1.msra.mxu0 0.0
      %1014 = vmatprep.subr.mxu0 0.0
      %1015 = vmatpush1.msra.mxu0 0.0
      %1016 = vmatprep.subr.mxu0 0.0
      %1017 = vmatpush1.msra.mxu0 0.0
      %1018 = vmatprep.subr.mxu0 0.0
      %1019 = vmatpush1.msra.mxu0 0.0
      %1020 = vmatprep.subr.mxu0 0.0
      %1021 = vmatpush1.msra.mxu0 0.0
      %1022 = vmatprep.subr.mxu0 0.0
      %1023 = vmatpush1.msra.mxu0 0.0
      %1024 = vmatprep.subr.mxu0 0.0
      %1025 = vmatpush1.msra.mxu0 0.0
      %1026 = vmatprep.subr.mxu0 0.0
      %1027 = vmatpush1.msra.mxu0 0.0
      %1028 = vmatprep.subr.mxu0 0.0
      %1029 = vmatpush1.msra.mxu0 0.0
      %1030 = vmatprep.subr.mxu0 0.0
      %1031 = vmatpush1.msra.mxu0 0.0
      %1032 = vmatprep.subr.mxu0 0.0
      %1033 = vmatpush1.msra.mxu0 0.0
      %1034 = vmatprep.subr.mxu0 0.0
      %1035 = vmatpush1.msra.mxu0 0.0
      %1036 = vmatprep.subr.mxu0 0.0
      %1037 = vmatpush1.msra.mxu0 0.0
      %1038 = vmatprep.subr.mxu0 0.0
      %1039 = vmatpush1.msra.mxu0 0.0
      %1040 = vmatprep.mubr.f32.mxu0 0.0
      %v1041 = vand.u32 %v375, 4294901760
      %1042 = vmatmul.mubr.f32.gmra.mrb[0].mxu0 %v1041
      %v1043 = vpop.f32.mrb[0].mxu0
      %v1044 = vadd.f32 %v946, %v1043
      %v1045 = vpop.f32.mrb[0].mxu0
      %1046 = vmatprep.mubr.f32.mxu0 0.0
      %v1047 = vand.u32 %v378, 4294901760
      %1048 = vmatmul.mubr.f32.gmra.mrb[0].mxu0 %v1047
      %v1049 = vpop.f32.mrb[0].mxu0
      %v1050 = vadd.f32 %v952, %v1049
      %v1051 = vpop.f32.mrb[0].mxu0
      %1052 = vmatprep.mubr.f32.mxu0 0.0
      %v1053 = vand.u32 %v381, 4294901760
      %1054 = vmatmul.mubr.f32.gmra.mrb[0].mxu0 %v1053
      %v1055 = vpop.f32.mrb[0].mxu0
      %v1056 = vadd.f32 %v958, %v1055
      %v1057 = vpop.f32.mrb[0].mxu0
      %1058 = vmatprep.mubr.f32.mxu0 0.0
      %v1059 = vand.u32 %v384, 4294901760
      %1060 = vmatmul.mubr.f32.gmra.mrb[0].mxu0 %v1059
      %v1061 = vpop.f32.mrb[0].mxu0
      %v1062 = vadd.f32 %v964, %v1061
      %v1063 = vpop.f32.mrb[0].mxu0
      %1064 = vdwg.mxu0
      %v1065 = vld [vmem:[%s2] sm:$0x1]
      %v1067 = vlaneseq
      %v1068 = vshrl.u32 %v1067, 7
      %v1069 = vsub.s32 0, %v1068
      %v1070 = vrot.slane %v1065, %v1069
      %v1072 = vmul.f32 %v1044, %v1070
      %v1073 = vmul.f32 %v1050, %v1070
      %v1074 = vmul.f32 %v1056, %v1070
      %v1075 = vmul.f32 %v1062, %v1070
      %v1076 = vld [vmem:[%s3] sm:$0x1]
      %v1078 = vlaneseq
      %v1079 = vshrl.u32 %v1078, 7
      %v1080 = vsub.s32 0, %v1079
      %v1081 = vrot.slane %v1076, %v1080
      %v1083 = vadd.f32 %v1072, %v1081
      %v1084 = vadd.f32 %v1073, %v1081
      %v1085 = vadd.f32 %v1074, %v1081
      %v1086 = vadd.f32 %v1075, %v1081
      %v1087 = vmax.f32 %v1083, 0.0
      %v1088 = vmax.f32 %v1084, 0.0
      %v1089 = vmax.f32 %v1085, 0.0
      %v1090 = vmax.f32 %v1086, 0.0
      %v1091 = vmin.f32 %v1087, 6.0
      %v1092 = vmin.f32 %v1088, 6.0
      %v1093 = vmin.f32 %v1089, 6.0
      %v1094 = vmin.f32 %v1090, 6.0
      %1095 = vst [vmem:[#allocation2] sm:$0xff] 0.0
      %1096 = vst [vmem:[#allocation2 + $0x8] sm:$0x3] 0.0
      %s1097 = scalar_lea.vmem [#allocation2], 80
      %1098 = vst [vmem:[%s1097] sm:$0xff] 0.0
      %1099 = vst [vmem:[%s1097 + $0x8] sm:$0x3] 0.0
      %s1100 = scalar_lea.vmem [#allocation2], 16
      %1101 = vst [vmem:[%s1100] sm:$0x1] 0.0
      %1102 = vst [vmem:[%s1100 + $0x10] sm:$0x1] 0.0
      %1103 = vst [vmem:[%s1100 + $0x20] sm:$0x1] 0.0
      %1104 = vst [vmem:[%s1100 + $0x30] sm:$0x1] 0.0
      %1105 = vst [vmem:[%s1100 + $0x9] sm:$0x1] 0.0
      %1106 = vst [vmem:[%s1100 + $0x19] sm:$0x1] 0.0
      %1107 = vst [vmem:[%s1100 + $0x29] sm:$0x1] 0.0
      %1108 = vst [vmem:[%s1100 + $0x39] sm:$0x1] 0.0
      %1109 = vst [vmem:[%s1100 + $0x1] sm:$0xff] %v1091
      %1110 = vst [vmem:[%s1100 + $0x11] sm:$0xff] %v1092
      %1111 = vst [vmem:[%s1100 + $0x21] sm:$0xff] %v1093
      %1112 = vst [vmem:[%s1100 + $0x31] sm:$0xff] %v1094
      %v1113 = vld [vmem:[%s4] sm:$0x7]
      %v1114 = vld [vmem:[%s4 + $0x4] sm:$0x7]
      %v1115 = vld [vmem:[%s4 + $0x8] sm:$0x7]
      %v1116 = vld [vmem:[#allocation2] sm:$0xff]
      %v1117 = vld [vmem:[#allocation2 + $0x10] sm:$0xff]
      %v1118 = vld [vmem:[#allocation2 + $0x20] sm:$0xff]
      %v1119 = vld [vmem:[#allocation2 + $0x30] sm:$0xff]
      %v1120 = vlaneseq
      %v1121 = vshrl.u32 %v1120, 7
      %v1122 = vsub.s32 0, %v1121
      %v1123 = vrot.slane %v1113, %v1122
      %v1124 = vmul.f32 %v1116, %v1123
      %v1125 = vmul.f32 %v1117, %v1123
      %v1126 = vmul.f32 %v1118, %v1123
      %v1127 = vmul.f32 %v1119, %v1123
      %v1128 = vadd.f32 %v1124, 0.0
      %v1129 = vadd.f32 %v1125, 0.0
      %v1130 = vadd.f32 %v1126, 0.0
      %v1131 = vadd.f32 %v1127, 0.0
      %v1132 = vld [vmem:[#allocation2 + $0x1] sm:$0xff]
      %v1133 = vld [vmem:[#allocation2 + $0x11] sm:$0xff]
      %v1134 = vld [vmem:[#allocation2 + $0x21] sm:$0xff]
      %v1135 = vld [vmem:[#allocation2 + $0x31] sm:$0xff]
      %v1136 = vlaneseq
      %v1137 = vshrl.u32 %v1136, 7
      %v1138 = vsub.s32 1, %v1137
      %v1139 = vrot.slane %v1113, %v1138
      %v1140 = vmul.f32 %v1132, %v1139
      %v1141 = vmul.f32 %v1133, %v1139
      %v1142 = vmul.f32 %v1134, %v1139
      %v1143 = vmul.f32 %v1135, %v1139
      %v1144 = vadd.f32 %v1128, %v1140
      %v1145 = vadd.f32 %v1129, %v1141
      %v1146 = vadd.f32 %v1130, %v1142
      %v1147 = vadd.f32 %v1131, %v1143
      %v1148 = vld [vmem:[#allocation2 + $0x2] sm:$0xff]
      %v1149 = vld [vmem:[#allocation2 + $0x12] sm:$0xff]
      %v1150 = vld [vmem:[#allocation2 + $0x22] sm:$0xff]
      %v1151 = vld [vmem:[#allocation2 + $0x32] sm:$0xff]
      %v1152 = vlaneseq
      %v1153 = vshrl.u32 %v1152, 7
      %v1154 = vsub.s32 2, %v1153
      %v1155 = vrot.slane %v1113, %v1154
      %v1156 = vmul.f32 %v1148, %v1155
      %v1157 = vmul.f32 %v1149, %v1155
      %v1158 = vmul.f32 %v1150, %v1155
      %v1159 = vmul.f32 %v1151, %v1155
      %v1160 = vadd.f32 %v1144, %v1156
      %v1161 = vadd.f32 %v1145, %v1157
      %v1162 = vadd.f32 %v1146, %v1158
      %v1163 = vadd.f32 %v1147, %v1159
      %v1164 = vld [vmem:[%s1100] sm:$0xff]
      %v1165 = vld [vmem:[%s1100 + $0x10] sm:$0xff]
      %v1166 = vld [vmem:[%s1100 + $0x20] sm:$0xff]
      %v1167 = vld [vmem:[%s1100 + $0x30] sm:$0xff]
      %v1168 = vlaneseq
      %v1169 = vshrl.u32 %v1168, 7
      %v1170 = vsub.s32 0, %v1169
      %v1171 = vrot.slane %v1114, %v1170
      %v1172 = vmul.f32 %v1164, %v1171
      %v1173 = vmul.f32 %v1165, %v1171
      %v1174 = vmul.f32 %v1166, %v1171
      %v1175 = vmul.f32 %v1167, %v1171
      %v1176 = vadd.f32 %v1160, %v1172
      %v1177 = vadd.f32 %v1161, %v1173
      %v1178 = vadd.f32 %v1162, %v1174
      %v1179 = vadd.f32 %v1163, %v1175
      %v1180 = vld [vmem:[%s1100 + $0x1] sm:$0xff]
      %v1181 = vld [vmem:[%s1100 + $0x11] sm:$0xff]
      %v1182 = vld [vmem:[%s1100 + $0x21] sm:$0xff]
      %v1183 = vld [vmem:[%s1100 + $0x31] sm:$0xff]
      %v1184 = vlaneseq
      %v1185 = vshrl.u32 %v1184, 7
      %v1186 = vsub.s32 1, %v1185
      %v1187 = vrot.slane %v1114, %v1186
      %v1188 = vmul.f32 %v1180, %v1187
      %v1189 = vmul.f32 %v1181, %v1187
      %v1190 = vmul.f32 %v1182, %v1187
      %v1191 = vmul.f32 %v1183, %v1187
      %v1192 = vadd.f32 %v1176, %v1188
      %v1193 = vadd.f32 %v1177, %v1189
      %v1194 = vadd.f32 %v1178, %v1190
      %v1195 = vadd.f32 %v1179, %v1191
      %v1196 = vld [vmem:[%s1100 + $0x2] sm:$0xff]
      %v1197 = vld [vmem:[%s1100 + $0x12] sm:$0xff]
      %v1198 = vld [vmem:[%s1100 + $0x22] sm:$0xff]
      %v1199 = vld [vmem:[%s1100 + $0x32] sm:$0xff]
      %v1200 = vlaneseq
      %v1201 = vshrl.u32 %v1200, 7
      %v1202 = vsub.s32 2, %v1201
      %v1203 = vrot.slane %v1114, %v1202
      %v1204 = vmul.f32 %v1196, %v1203
      %v1205 = vmul.f32 %v1197, %v1203
      %v1206 = vmul.f32 %v1198, %v1203
      %v1207 = vmul.f32 %v1199, %v1203
      %v1208 = vadd.f32 %v1192, %v1204
      %v1209 = vadd.f32 %v1193, %v1205
      %v1210 = vadd.f32 %v1194, %v1206
      %v1211 = vadd.f32 %v1195, %v1207
      %s1212 = scalar_lea.vmem [#allocation2], 32
      %v1213 = vld [vmem:[%s1212] sm:$0xff]
      %v1214 = vld [vmem:[%s1212 + $0x10] sm:$0xff]
      %v1215 = vld [vmem:[%s1212 + $0x20] sm:$0xff]
      %v1216 = vld [vmem:[%s1212 + $0x30] sm:$0xff]
      %v1217 = vlaneseq
      %v1218 = vshrl.u32 %v1217, 7
      %v1219 = vsub.s32 0, %v1218
      %v1220 = vrot.slane %v1115, %v1219
      %v1221 = vmul.f32 %v1213, %v1220
      %v1222 = vmul.f32 %v1214, %v1220
      %v1223 = vmul.f32 %v1215, %v1220
      %v1224 = vmul.f32 %v1216, %v1220
      %v1225 = vadd.f32 %v1208, %v1221
      %v1226 = vadd.f32 %v1209, %v1222
      %v1227 = vadd.f32 %v1210, %v1223
      %v1228 = vadd.f32 %v1211, %v1224
      %v1229 = vld [vmem:[%s1212 + $0x1] sm:$0xff]
      %v1230 = vld [vmem:[%s1212 + $0x11] sm:$0xff]
      %v1231 = vld [vmem:[%s1212 + $0x21] sm:$0xff]
      %v1232 = vld [vmem:[%s1212 + $0x31] sm:$0xff]
      %v1233 = vlaneseq
      %v1234 = vshrl.u32 %v1233, 7
      %v1235 = vsub.s32 1, %v1234
      %v1236 = vrot.slane %v1115, %v1235
      %v1237 = vmul.f32 %v1229, %v1236
      %v1238 = vmul.f32 %v1230, %v1236
      %v1239 = vmul.f32 %v1231, %v1236
      %v1240 = vmul.f32 %v1232, %v1236
      %v1241 = vadd.f32 %v1225, %v1237
      %v1242 = vadd.f32 %v1226, %v1238
      %v1243 = vadd.f32 %v1227, %v1239
      %v1244 = vadd.f32 %v1228, %v1240
      %v1245 = vld [vmem:[%s1212 + $0x2] sm:$0xff]
      %v1246 = vld [vmem:[%s1212 + $0x12] sm:$0xff]
      %v1247 = vld [vmem:[%s1212 + $0x22] sm:$0xff]
      %v1248 = vld [vmem:[%s1212 + $0x32] sm:$0xff]
      %v1249 = vlaneseq
      %v1250 = vshrl.u32 %v1249, 7
      %v1251 = vsub.s32 2, %v1250
      %v1252 = vrot.slane %v1115, %v1251
      %v1253 = vmul.f32 %v1245, %v1252
      %v1254 = vmul.f32 %v1246, %v1252
      %v1255 = vmul.f32 %v1247, %v1252
      %v1256 = vmul.f32 %v1248, %v1252
      %v1257 = vadd.f32 %v1241, %v1253
      %v1258 = vadd.f32 %v1242, %v1254
      %v1259 = vadd.f32 %v1243, %v1255
      %v1260 = vadd.f32 %v1244, %v1256
      %v1261 = vld [vmem:[%s5] sm:$0x1]
      %v1263 = vlaneseq
      %v1264 = vshrl.u32 %v1263, 7
      %v1265 = vsub.s32 0, %v1264
      %v1266 = vrot.slane %v1261, %v1265
      %v1268 = vmul.f32 %v1257, %v1266
      %v1269 = vmul.f32 %v1258, %v1266
      %v1270 = vmul.f32 %v1259, %v1266
      %v1271 = vmul.f32 %v1260, %v1266
      %v1272 = vld [vmem:[%s6] sm:$0x1]
      %v1274 = vlaneseq
      %v1275 = vshrl.u32 %v1274, 7
      %v1276 = vsub.s32 0, %v1275
      %v1277 = vrot.slane %v1272, %v1276
      %v1279 = vadd.f32 %v1268, %v1277
      %v1280 = vadd.f32 %v1269, %v1277
      %v1281 = vadd.f32 %v1270, %v1277
      %v1282 = vadd.f32 %v1271, %v1277
      %v1283 = vmax.f32 %v1279, 0.0
      %v1284 = vmax.f32 %v1280, 0.0
      %v1285 = vmax.f32 %v1281, 0.0
      %v1286 = vmax.f32 %v1282, 0.0
      %v1287 = vmin.f32 %v1283, 6.0
      %v1288 = vmin.f32 %v1284, 6.0
      %v1289 = vmin.f32 %v1285, 6.0
      %v1290 = vmin.f32 %v1286, 6.0
      %v1291 = vld [vmem:[%s7] sm:$0xff]
      %v1292 = vld [vmem:[%s7 + $0x8] sm:$0xff]
      %v1293 = vld [vmem:[%s7 + $0x10] sm:$0xff]
      %v1294 = vld [vmem:[%s7 + $0x18] sm:$0xff]
      %v1295 = vld [vmem:[%s7 + $0x20] sm:$0xff]
      %v1296 = vld [vmem:[%s7 + $0x28] sm:$0xff]
      %v1297 = vld [vmem:[%s7 + $0x30] sm:$0xff]
      %v1298 = vld [vmem:[%s7 + $0x38] sm:$0xff]
      %v1299 = vld [vmem:[%s7 + $0x40] sm:$0xff]
      %v1300 = vld [vmem:[%s7 + $0x48] sm:$0xff]
      %v1301 = vld [vmem:[%s7 + $0x50] sm:$0xff]
      %v1302 = vld [vmem:[%s7 + $0x58] sm:$0xff]
      %v1303 = vld [vmem:[%s7 + $0x60] sm:$0xff]
      %v1304 = vld [vmem:[%s7 + $0x68] sm:$0xff]
      %v1305 = vld [vmem:[%s7 + $0x70] sm:$0xff]
      %v1306 = vld [vmem:[%s7 + $0x78] sm:$0xff]
      %1307 = vmatprep.subr.mxu0 0.0
      %v1308 = vand.u32 %v1291, 4294901760
      %1309 = vmatpush1.msra.mxu0 %v1308
      %1310 = vmatprep.subr.mxu0 0.0
      %v1311 = vand.u32 %v1292, 4294901760
      %1312 = vmatpush1.msra.mxu0 %v1311
      %1313 = vmatprep.subr.mxu0 0.0
      %v1314 = vand.u32 %v1293, 4294901760
      %1315 = vmatpush1.msra.mxu0 %v1314
      %1316 = vmatprep.subr.mxu0 0.0
      %v1317 = vand.u32 %v1294, 4294901760
      %1318 = vmatpush1.msra.mxu0 %v1317
      %1319 = vmatprep.subr.mxu0 0.0
      %v1320 = vand.u32 %v1295, 4294901760
      %1321 = vmatpush1.msra.mxu0 %v1320
      %1322 = vmatprep.subr.mxu0 0.0
      %v1323 = vand.u32 %v1296, 4294901760
      %1324 = vmatpush1.msra.mxu0 %v1323
      %1325 = vmatprep.subr.mxu0 0.0
      %v1326 = vand.u32 %v1297, 4294901760
      %1327 = vmatpush1.msra.mxu0 %v1326
      %1328 = vmatprep.subr.mxu0 0.0
      %v1329 = vand.u32 %v1298, 4294901760
      %1330 = vmatpush1.msra.mxu0 %v1329
      %1331 = vmatprep.subr.mxu0 0.0
      %v1332 = vand.u32 %v1299, 4294901760
      %1333 = vmatpush1.msra.mxu0 %v1332
      %1334 = vmatprep.subr.mxu0 0.0
      %v1335 = vand.u32 %v1300, 4294901760
      %1336 = vmatpush1.msra.mxu0 %v1335
      %1337 = vmatprep.subr.mxu0 0.0
      %v1338 = vand.u32 %v1301, 4294901760
      %1339 = vmatpush1.msra.mxu0 %v1338
      %1340 = vmatprep.subr.mxu0 0.0
      %v1341 = vand.u32 %v1302, 4294901760
      %1342 = vmatpush1.msra.mxu0 %v1341
      %1343 = vmatprep.subr.mxu0 0.0
      %v1344 = vand.u32 %v1303, 4294901760
      %1345 = vmatpush1.msra.mxu0 %v1344
      %1346 = vmatprep.subr.mxu0 0.0
      %v1347 = vand.u32 %v1304, 4294901760
      %1348 = vmatpush1.msra.mxu0 %v1347
      %1349 = vmatprep.subr.mxu0 0.0
      %v1350 = vand.u32 %v1305, 4294901760
      %1351 = vmatpush1.msra.mxu0 %v1350
      %1352 = vmatprep.subr.mxu0 0.0
      %v1353 = vand.u32 %v1306, 4294901760
      %1354 = vmatpush1.msra.mxu0 %v1353
      %1355 = vmatprep.subr.mxu0 0.0
      %1356 = vmatpush1.msra.mxu0 0.0
      %1357 = vmatprep.subr.mxu0 0.0
      %1358 = vmatpush1.msra.mxu0 0.0
      %1359 = vmatprep.subr.mxu0 0.0
      %1360 = vmatpush1.msra.mxu0 0.0
      %1361 = vmatprep.subr.mxu0 0.0
      %1362 = vmatpush1.msra.mxu0 0.0
      %1363 = vmatprep.subr.mxu0 0.0
      %1364 = vmatpush1.msra.mxu0 0.0
      %1365 = vmatprep.subr.mxu0 0.0
      %1366 = vmatpush1.msra.mxu0 0.0
      %1367 = vmatprep.subr.mxu0 0.0
      %1368 = vmatpush1.msra.mxu0 0.0
      %1369 = vmatprep.subr.mxu0 0.0
      %1370 = vmatpush1.msra.mxu0 0.0
      %1371 = vmatprep.subr.mxu0 0.0
      %1372 = vmatpush1.msra.mxu0 0.0
      %1373 = vmatprep.subr.mxu0 0.0
      %1374 = vmatpush1.msra.mxu0 0.0
      %1375 = vmatprep.subr.mxu0 0.0
      %1376 = vmatpush1.msra.mxu0 0.0
      %1377 = vmatprep.subr.mxu0 0.0
      %1378 = vmatpush1.msra.mxu0 0.0
      %1379 = vmatprep.subr.mxu0 0.0
      %1380 = vmatpush1.msra.mxu0 0.0
      %1381 = vmatprep.subr.mxu0 0.0
      %1382 = vmatpush1.msra.mxu0 0.0
      %1383 = vmatprep.subr.mxu0 0.0
      %1384 = vmatpush1.msra.mxu0 0.0
      %1385 = vmatprep.subr.mxu0 0.0
      %1386 = vmatpush1.msra.mxu0 0.0
      %1387 = vmatprep.mubr.f32.mxu0 0.0
      %v1388 = vand.u32 %v1180, 4294901760
      %v1389 = vsub.f32 %v1180, %v1388
      %v1390 = vand.u32 %v1389, 4294901760
      %v1391 = vsub.f32 %v1389, %v1390
      %v1392 = vand.u32 %v1391, 4294901760
      %1393 = vmatmul.mubr.f32.gmra.mrb[0].mxu0 %v1392
      %v1394 = vpop.f32.mrb[0].mxu0
      %v1395 = vadd.f32 0.0, %v1394
      %v1396 = vpop.f32.mrb[0].mxu0
      %1397 = vmatprep.mubr.f32.mxu0 0.0
      %v1398 = vand.u32 %v1181, 4294901760
      %v1399 = vsub.f32 %v1181, %v1398
      %v1400 = vand.u32 %v1399, 4294901760
      %v1401 = vsub.f32 %v1399, %v1400
      %v1402 = vand.u32 %v1401, 4294901760
      %1403 = vmatmul.mubr.f32.gmra.mrb[0].mxu0 %v1402
      %v1404 = vpop.f32.mrb[0].mxu0
      %v1405 = vadd.f32 0.0, %v1404
      %v1406 = vpop.f32.mrb[0].mxu0
      %1407 = vmatprep.mubr.f32.mxu0 0.0
      %v1408 = vand.u32 %v1182, 4294901760
      %v1409 = vsub.f32 %v1182, %v1408
      %v1410 = vand.u32 %v1409, 4294901760
      %v1411 = vsub.f32 %v1409, %v1410
      %v1412 = vand.u32 %v1411, 4294901760
      %1413 = vmatmul.mubr.f32.gmra.mrb[0].mxu0 %v1412
      %v1414 = vpop.f32.mrb[0].mxu0
      %v1415 = vadd.f32 0.0, %v1414
      %v1416 = vpop.f32.mrb[0].mxu0
      %1417 = vmatprep.mubr.f32.mxu0 0.0
      %v1418 = vand.u32 %v1183, 4294901760
      %v1419 = vsub.f32 %v1183, %v1418
      %v1420 = vand.u32 %v1419, 4294901760
      %v1421 = vsub.f32 %v1419, %v1420
      %v1422 = vand.u32 %v1421, 4294901760
      %1423 = vmatmul.mubr.f32.gmra.mrb[0].mxu0 %v1422
      %v1424 = vpop.f32.mrb[0].mxu0
      %v1425 = vadd.f32 0.0, %v1424
      %v1426 = vpop.f32.mrb[0].mxu0
      %1427 = vdwg.mxu0
      %1428 = vmatprep.subr.mxu0 0.0
      %v1429 = vand.u32 %v1291, 4294901760
      %v1430 = vsub.f32 %v1291, %v1429
      %v1431 = vand.u32 %v1430, 4294901760
      %v1432 = vsub.f32 %v1430, %v1431
      %v1433 = vand.u32 %v1432, 4294901760
      %1434 = vmatpush1.msra.mxu0 %v1433
      %1435 = vmatprep.subr.mxu0 0.0
      %v1436 = vand.u32 %v1292, 4294901760
      %v1437 = vsub.f32 %v1292, %v1436
      %v1438 = vand.u32 %v1437, 4294901760
      %v1439 = vsub.f32 %v1437, %v1438
      %v1440 = vand.u32 %v1439, 4294901760
      %1441 = vmatpush1.msra.mxu0 %v1440
      %1442 = vmatprep.subr.mxu0 0.0
      %v1443 = vand.u32 %v1293, 4294901760
      %v1444 = vsub.f32 %v1293, %v1443
      %v1445 = vand.u32 %v1444, 4294901760
      %v1446 = vsub.f32 %v1444, %v1445
      %v1447 = vand.u32 %v1446, 4294901760
      %1448 = vmatpush1.msra.mxu0 %v1447
      %1449 = vmatprep.subr.mxu0 0.0
      %v1450 = vand.u32 %v1294, 4294901760
      %v1451 = vsub.f32 %v1294, %v1450
      %v1452 = vand.u32 %v1451, 4294901760
      %v1453 = vsub.f32 %v1451, %v1452
      %v1454 = vand.u32 %v1453, 4294901760
      %1455 = vmatpush1.msra.mxu0 %v1454
      %1456 = vmatprep.subr.mxu0 0.0
      %v1457 = vand.u32 %v1295, 4294901760
      %v1458 = vsub.f32 %v1295, %v1457
      %v1459 = vand.u32 %v1458, 4294901760
      %v1460 = vsub.f32 %v1458, %v1459
      %v1461 = vand.u32 %v1460, 4294901760
      %1462 = vmatpush1.msra.mxu0 %v1461
      %1463 = vmatprep.subr.mxu0 0.0
      %v1464 = vand.u32 %v1296, 4294901760
      %v1465 = vsub.f32 %v1296, %v1464
      %v1466 = vand.u32 %v1465, 4294901760
      %v1467 = vsub.f32 %v1465, %v1466
      %v1468 = vand.u32 %v1467, 4294901760
      %1469 = vmatpush1.msra.mxu0 %v1468
      %1470 = vmatprep.subr.mxu0 0.0
      %v1471 = vand.u32 %v1297, 4294901760
      %v1472 = vsub.f32 %v1297, %v1471
      %v1473 = vand.u32 %v1472, 4294901760
      %v1474 = vsub.f32 %v1472, %v1473
      %v1475 = vand.u32 %v1474, 4294901760
      %1476 = vmatpush1.msra.mxu0 %v1475
      %1477 = vmatprep.subr.mxu0 0.0
      %v1478 = vand.u32 %v1298, 4294901760
      %v1479 = vsub.f32 %v1298, %v1478
      %v1480 = vand.u32 %v1479, 4294901760
      %v1481 = vsub.f32 %v1479, %v1480
      %v1482 = vand.u32 %v1481, 4294901760
      %1483 = vmatpush1.msra.mxu0 %v1482
      %1484 = vmatprep.subr.mxu0 0.0
      %v1485 = vand.u32 %v1299, 4294901760
      %v1486 = vsub.f32 %v1299, %v1485
      %v1487 = vand.u32 %v1486, 4294901760
      %v1488 = vsub.f32 %v1486, %v1487
      %v1489 = vand.u32 %v1488, 4294901760
      %1490 = vmatpush1.msra.mxu0 %v1489
      %1491 = vmatprep.subr.mxu0 0.0
      %v1492 = vand.u32 %v1300, 4294901760
      %v1493 = vsub.f32 %v1300, %v1492
      %v1494 = vand.u32 %v1493, 4294901760
      %v1495 = vsub.f32 %v1493, %v1494
      %v1496 = vand.u32 %v1495, 4294901760
      %1497 = vmatpush1.msra.mxu0 %v1496
      %1498 = vmatprep.subr.mxu0 0.0
      %v1499 = vand.u32 %v1301, 4294901760
      %v1500 = vsub.f32 %v1301, %v1499
      %v1501 = vand.u32 %v1500, 4294901760
      %v1502 = vsub.f32 %v1500, %v1501
      %v1503 = vand.u32 %v1502, 4294901760
      %1504 = vmatpush1.msra.mxu0 %v1503
      %1505 = vmatprep.subr.mxu0 0.0
      %v1506 = vand.u32 %v1302, 4294901760
      %v1507 = vsub.f32 %v1302, %v1506
      %v1508 = vand.u32 %v1507, 4294901760
      %v1509 = vsub.f32 %v1507, %v1508
      %v1510 = vand.u32 %v1509, 4294901760
      %1511 = vmatpush1.msra.mxu0 %v1510
      %1512 = vmatprep.subr.mxu0 0.0
      %v1513 = vand.u32 %v1303, 4294901760
      %v1514 = vsub.f32 %v1303, %v1513
      %v1515 = vand.u32 %v1514, 4294901760
      %v1516 = vsub.f32 %v1514, %v1515
      %v1517 = vand.u32 %v1516, 4294901760
      %1518 = vmatpush1.msra.mxu0 %v1517
      %1519 = vmatprep.subr.mxu0 0.0
      %v1520 = vand.u32 %v1304, 4294901760
      %v1521 = vsub.f32 %v1304, %v1520
      %v1522 = vand.u32 %v1521, 4294901760
      %v1523 = vsub.f32 %v1521, %v1522
      %v1524 = vand.u32 %v1523, 4294901760
      %1525 = vmatpush1.msra.mxu0 %v1524
      %1526 = vmatprep.subr.mxu0 0.0
      %v1527 = vand.u32 %v1305, 4294901760
      %v1528 = vsub.f32 %v1305, %v1527
      %v1529 = vand.u32 %v1528, 4294901760
      %v1530 = vsub.f32 %v1528, %v1529
      %v1531 = vand.u32 %v1530, 4294901760
      %1532 = vmatpush1.msra.mxu0 %v1531
      %1533 = vmatprep.subr.mxu0 0.0
      %v1534 = vand.u32 %v1306, 4294901760
      %v1535 = vsub.f32 %v1306, %v1534
      %v1536 = vand.u32 %v1535, 4294901760
      %v1537 = vsub.f32 %v1535, %v1536
      %v1538 = vand.u32 %v1537, 4294901760
      %1539 = vmatpush1.msra.mxu0 %v1538
      %1540 = vmatprep.subr.mxu0 0.0
      %1541 = vmatpush1.msra.mxu0 0.0
      %1542 = vmatprep.subr.mxu0 0.0
      %1543 = vmatpush1.msra.mxu0 0.0
      %1544 = vmatprep.subr.mxu0 0.0
      %1545 = vmatpush1.msra.mxu0 0.0
      %1546 = vmatprep.subr.mxu0 0.0
      %1547 = vmatpush1.msra.mxu0 0.0
      %1548 = vmatprep.subr.mxu0 0.0
      %1549 = vmatpush1.msra.mxu0 0.0
      %1550 = vmatprep.subr.mxu0 0.0
      %1551 = vmatpush1.msra.mxu0 0.0
      %1552 = vmatprep.subr.mxu0 0.0
      %1553 = vmatpush1.msra.mxu0 0.0
      %1554 = vmatprep.subr.mxu0 0.0
      %1555 = vmatpush1.msra.mxu0 0.0
      %1556 = vmatprep.subr.mxu0 0.0
      %1557 = vmatpush1.msra.mxu0 0.0
      %1558 = vmatprep.subr.mxu0 0.0
      %1559 = vmatpush1.msra.mxu0 0.0
      %1560 = vmatprep.subr.mxu0 0.0
      %1561 = vmatpush1.msra.mxu0 0.0
      %1562 = vmatprep.subr.mxu0 0.0
      %1563 = vmatpush1.msra.mxu0 0.0
      %1564 = vmatprep.subr.mxu0 0.0
      %1565 = vmatpush1.msra.mxu0 0.0
      %1566 = vmatprep.subr.mxu0 0.0
      %1567 = vmatpush1.msra.mxu0 0.0
      %1568 = vmatprep.subr.mxu0 0.0
      %1569 = vmatpush1.msra.mxu0 0.0
      %1570 = vmatprep.subr.mxu0 0.0
      %1571 = vmatpush1.msra.mxu0 0.0
      %1572 = vmatprep.mubr.f32.mxu0 0.0
      %v1573 = vand.u32 %v1180, 4294901760
      %1574 = vmatmul.mubr.f32.gmra.mrb[0].mxu0 %v1573
      %v1575 = vpop.f32.mrb[0].mxu0
      %v1576 = vadd.f32 %v1395, %v1575
      %v1577 = vpop.f32.mrb[0].mxu0
      %1578 = vmatprep.mubr.f32.mxu0 0.0
      %v1579 = vand.u32 %v1181, 4294901760
      %1580 = vmatmul.mubr.f32.gmra.mrb[0].mxu0 %v1579
      %v1581 = vpop.f32.mrb[0].mxu0
      %v1582 = vadd.f32 %v1405, %v1581
      %v1583 = vpop.f32.mrb[0].mxu0
      %1584 = vmatprep.mubr.f32.mxu0 0.0
      %v1585 = vand.u32 %v1182, 4294901760
      %1586 = vmatmul.mubr.f32.gmra.mrb[0].mxu0 %v1585
      %v1587 = vpop.f32.mrb[0].mxu0
      %v1588 = vadd.f32 %v1415, %v1587
      %v1589 = vpop.f32.mrb[0].mxu0
      %1590 = vmatprep.mubr.f32.mxu0 0.0
      %v1591 = vand.u32 %v1183, 4294901760
      %1592 = vmatmul.mubr.f32.gmra.mrb[0].mxu0 %v1591
      %v1593 = vpop.f32.mrb[0].mxu0
      %v1594 = vadd.f32 %v1425, %v1593
      %v1595 = vpop.f32.mrb[0].mxu0
      %1596 = vdwg.mxu0
      %1597 = vmatprep.subr.mxu0 0.0
      %v1598 = vand.u32 %v1291, 4294901760
      %v1599 = vsub.f32 %v1291, %v1598
      %1600 = vmatpush1.msra.mxu0 %v1599
      %1601 = vmatprep.subr.mxu0 0.0
      %v1602 = vand.u32 %v1292, 4294901760
      %v1603 = vsub.f32 %v1292, %v1602
      %1604 = vmatpush1.msra.mxu0 %v1603
      %1605 = vmatprep.subr.mxu0 0.0
      %v1606 = vand.u32 %v1293, 4294901760
      %v1607 = vsub.f32 %v1293, %v1606
      %1608 = vmatpush1.msra.mxu0 %v1607
      %1609 = vmatprep.subr.mxu0 0.0
      %v1610 = vand.u32 %v1294, 4294901760
      %v1611 = vsub.f32 %v1294, %v1610
      %1612 = vmatpush1.msra.mxu0 %v1611
      %1613 = vmatprep.subr.mxu0 0.0
      %v1614 = vand.u32 %v1295, 4294901760
      %v1615 = vsub.f32 %v1295, %v1614
      %1616 = vmatpush1.msra.mxu0 %v1615
      %1617 = vmatprep.subr.mxu0 0.0
      %v1618 = vand.u32 %v1296, 4294901760
      %v1619 = vsub.f32 %v1296, %v1618
      %1620 = vmatpush1.msra.mxu0 %v1619
      %1621 = vmatprep.subr.mxu0 0.0
      %v1622 = vand.u32 %v1297, 4294901760
      %v1623 = vsub.f32 %v1297, %v1622
      %1624 = vmatpush1.msra.mxu0 %v1623
      %1625 = vmatprep.subr.mxu0 0.0
      %v1626 = vand.u32 %v1298, 4294901760
      %v1627 = vsub.f32 %v1298, %v1626
      %1628 = vmatpush1.msra.mxu0 %v1627
      %1629 = vmatprep.subr.mxu0 0.0
      %v1630 = vand.u32 %v1299, 4294901760
      %v1631 = vsub.f32 %v1299, %v1630
      %1632 = vmatpush1.msra.mxu0 %v1631
      %1633 = vmatprep.subr.mxu0 0.0
      %v1634 = vand.u32 %v1300, 4294901760
      %v1635 = vsub.f32 %v1300, %v1634
      %1636 = vmatpush1.msra.mxu0 %v1635
      %1637 = vmatprep.subr.mxu0 0.0
      %v1638 = vand.u32 %v1301, 4294901760
      %v1639 = vsub.f32 %v1301, %v1638
      %1640 = vmatpush1.msra.mxu0 %v1639
      %1641 = vmatprep.subr.mxu0 0.0
      %v1642 = vand.u32 %v1302, 4294901760
      %v1643 = vsub.f32 %v1302, %v1642
      %1644 = vmatpush1.msra.mxu0 %v1643
      %1645 = vmatprep.subr.mxu0 0.0
      %v1646 = vand.u32 %v1303, 4294901760
      %v1647 = vsub.f32 %v1303, %v1646
      %1648 = vmatpush1.msra.mxu0 %v1647
      %1649 = vmatprep.subr.mxu0 0.0
      %v1650 = vand.u32 %v1304, 4294901760
      %v1651 = vsub.f32 %v1304, %v1650
      %1652 = vmatpush1.msra.mxu0 %v1651
      %1653 = vmatprep.subr.mxu0 0.0
      %v1654 = vand.u32 %v1305, 4294901760
      %v1655 = vsub.f32 %v1305, %v1654
      %1656 = vmatpush1.msra.mxu0 %v1655
      %1657 = vmatprep.subr.mxu0 0.0
      %v1658 = vand.u32 %v1306, 4294901760
      %v1659 = vsub.f32 %v1306, %v1658
      %1660 = vmatpush1.msra.mxu0 %v1659
      %1661 = vmatprep.subr.mxu0 0.0
      %1662 = vmatpush1.msra.mxu0 0.0
      %1663 = vmatprep.subr.mxu0 0.0
      %1664 = vmatpush1.msra.mxu0 0.0
      %1665 = vmatprep.subr.mxu0 0.0
      %1666 = vmatpush1.msra.mxu0 0.0
      %1667 = vmatprep.subr.mxu0 0.0
      %1668 = vmatpush1.msra.mxu0 0.0
      %1669 = vmatprep.subr.mxu0 0.0
      %1670 = vmatpush1.msra.mxu0 0.0
      %1671 = vmatprep.subr.mxu0 0.0
      %1672 = vmatpush1.msra.mxu0 0.0
      %1673 = vmatprep.subr.mxu0 0.0
      %1674 = vmatpush1.msra.mxu0 0.0
      %1675 = vmatprep.subr.mxu0 0.0
      %1676 = vmatpush1.msra.mxu0 0.0
      %1677 = vmatprep.subr.mxu0 0.0
      %1678 = vmatpush1.msra.mxu0 0.0
      %1679 = vmatprep.subr.mxu0 0.0
      %1680 = vmatpush1.msra.mxu0 0.0
      %1681 = vmatprep.subr.mxu0 0.0
      %1682 = vmatpush1.msra.mxu0 0.0
      %1683 = vmatprep.subr.mxu0 0.0
      %1684 = vmatpush1.msra.mxu0 0.0
      %1685 = vmatprep.subr.mxu0 0.0
      %1686 = vmatpush1.msra.mxu0 0.0
      %1687 = vmatprep.subr.mxu0 0.0
      %1688 = vmatpush1.msra.mxu0 0.0
      %1689 = vmatprep.subr.mxu0 0.0
      %1690 = vmatpush1.msra.mxu0 0.0
      %1691 = vmatprep.subr.mxu0 0.0
      %1692 = vmatpush1.msra.mxu0 0.0
      %1693 = vmatprep.mubr.f32.mxu0 0.0
      %v1694 = vand.u32 %v1180, 4294901760
      %v1695 = vsub.f32 %v1180, %v1694
      %1696 = vmatmul.mubr.f32.gmra.mrb[0].mxu0 %v1695
      %v1697 = vpop.f32.mrb[0].mxu0
      %v1698 = vadd.f32 %v1576, %v1697
      %v1699 = vpop.f32.mrb[0].mxu0
      %1700 = vmatprep.mubr.f32.mxu0 0.0
      %v1701 = vand.u32 %v1181, 4294901760
      %v1702 = vsub.f32 %v1181, %v1701
      %1703 = vmatmul.mubr.f32.gmra.mrb[0].mxu0 %v1702
      %v1704 = vpop.f32.mrb[0].mxu0
      %v1705 = vadd.f32 %v1582, %v1704
      %v1706 = vpop.f32.mrb[0].mxu0
      %1707 = vmatprep.mubr.f32.mxu0 0.0
      %v1708 = vand.u32 %v1182, 4294901760
      %v1709 = vsub.f32 %v1182, %v1708
      %1710 = vmatmul.mubr.f32.gmra.mrb[0].mxu0 %v1709
      %v1711 = vpop.f32.mrb[0].mxu0
      %v1712 = vadd.f32 %v1588, %v1711
      %v1713 = vpop.f32.mrb[0].mxu0
      %1714 = vmatprep.mubr.f32.mxu0 0.0
      %v1715 = vand.u32 %v1183, 4294901760
      %v1716 = vsub.f32 %v1183, %v1715
      %1717 = vmatmul.mubr.f32.gmra.mrb[0].mxu0 %v1716
      %v1718 = vpop.f32.mrb[0].mxu0
      %v1719 = vadd.f32 %v1594, %v1718
      %v1720 = vpop.f32.mrb[0].mxu0
      %1721 = vdwg.mxu0
      %1722 = vmatprep.subr.mxu0 0.0
      %v1723 = vand.u32 %v1291, 4294901760
      %1724 = vmatpush1.msra.mxu0 %v1723
      %1725 = vmatprep.subr.mxu0 0.0
      %v1726 = vand.u32 %v1292, 4294901760
      %1727 = vmatpush1.msra.mxu0 %v1726
      %1728 = vmatprep.subr.mxu0 0.0
      %v1729 = vand.u32 %v1293, 4294901760
      %1730 = vmatpush1.msra.mxu0 %v1729
      %1731 = vmatprep.subr.mxu0 0.0
      %v1732 = vand.u32 %v1294, 4294901760
      %1733 = vmatpush1.msra.mxu0 %v1732
      %1734 = vmatprep.subr.mxu0 0.0
      %v1735 = vand.u32 %v1295, 4294901760
      %1736 = vmatpush1.msra.mxu0 %v1735
      %1737 = vmatprep.subr.mxu0 0.0
      %v1738 = vand.u32 %v1296, 4294901760
      %1739 = vmatpush1.msra.mxu0 %v1738
      %1740 = vmatprep.subr.mxu0 0.0
      %v1741 = vand.u32 %v1297, 4294901760
      %1742 = vmatpush1.msra.mxu0 %v1741
      %1743 = vmatprep.subr.mxu0 0.0
      %v1744 = vand.u32 %v1298, 4294901760
      %1745 = vmatpush1.msra.mxu0 %v1744
      %1746 = vmatprep.subr.mxu0 0.0
      %v1747 = vand.u32 %v1299, 4294901760
      %1748 = vmatpush1.msra.mxu0 %v1747
      %1749 = vmatprep.subr.mxu0 0.0
      %v1750 = vand.u32 %v1300, 4294901760
      %1751 = vmatpush1.msra.mxu0 %v1750
      %1752 = vmatprep.subr.mxu0 0.0
      %v1753 = vand.u32 %v1301, 4294901760
      %1754 = vmatpush1.msra.mxu0 %v1753
      %1755 = vmatprep.subr.mxu0 0.0
      %v1756 = vand.u32 %v1302, 4294901760
      %1757 = vmatpush1.msra.mxu0 %v1756
      %1758 = vmatprep.subr.mxu0 0.0
      %v1759 = vand.u32 %v1303, 4294901760
      %1760 = vmatpush1.msra.mxu0 %v1759
      %1761 = vmatprep.subr.mxu0 0.0
      %v1762 = vand.u32 %v1304, 4294901760
      %1763 = vmatpush1.msra.mxu0 %v1762
      %1764 = vmatprep.subr.mxu0 0.0
      %v1765 = vand.u32 %v1305, 4294901760
      %1766 = vmatpush1.msra.mxu0 %v1765
      %1767 = vmatprep.subr.mxu0 0.0
      %v1768 = vand.u32 %v1306, 4294901760
      %1769 = vmatpush1.msra.mxu0 %v1768
      %1770 = vmatprep.subr.mxu0 0.0
      %1771 = vmatpush1.msra.mxu0 0.0
      %1772 = vmatprep.subr.mxu0 0.0
      %1773 = vmatpush1.msra.mxu0 0.0
      %1774 = vmatprep.subr.mxu0 0.0
      %1775 = vmatpush1.msra.mxu0 0.0
      %1776 = vmatprep.subr.mxu0 0.0
      %1777 = vmatpush1.msra.mxu0 0.0
      %1778 = vmatprep.subr.mxu0 0.0
      %1779 = vmatpush1.msra.mxu0 0.0
      %1780 = vmatprep.subr.mxu0 0.0
      %1781 = vmatpush1.msra.mxu0 0.0
      %1782 = vmatprep.subr.mxu0 0.0
      %1783 = vmatpush1.msra.mxu0 0.0
      %1784 = vmatprep.subr.mxu0 0.0
      %1785 = vmatpush1.msra.mxu0 0.0
      %1786 = vmatprep.subr.mxu0 0.0
      %1787 = vmatpush1.msra.mxu0 0.0
      %1788 = vmatprep.subr.mxu0 0.0
      %1789 = vmatpush1.msra.mxu0 0.0
      %1790 = vmatprep.subr.mxu0 0.0
      %1791 = vmatpush1.msra.mxu0 0.0
      %1792 = vmatprep.subr.mxu0 0.0
      %1793 = vmatpush1.msra.mxu0 0.0
      %1794 = vmatprep.subr.mxu0 0.0
      %1795 = vmatpush1.msra.mxu0 0.0
      %1796 = vmatprep.subr.mxu0 0.0
      %1797 = vmatpush1.msra.mxu0 0.0
      %1798 = vmatprep.subr.mxu0 0.0
      %1799 = vmatpush1.msra.mxu0 0.0
      %1800 = vmatprep.subr.mxu0 0.0
      %1801 = vmatpush1.msra.mxu0 0.0
      %1802 = vmatprep.mubr.f32.mxu0 0.0
      %v1803 = vand.u32 %v1180, 4294901760
      %v1804 = vsub.f32 %v1180, %v1803
      %v1805 = vand.u32 %v1804, 4294901760
      %1806 = vmatmul.mubr.f32.gmra.mrb[0].mxu0 %v1805
      %v1807 = vpop.f32.mrb[0].mxu0
      %v1808 = vadd.f32 %v1698, %v1807
      %v1809 = vpop.f32.mrb[0].mxu0
      %1810 = vmatprep.mubr.f32.mxu0 0.0
      %v1811 = vand.u32 %v1181, 4294901760
      %v1812 = vsub.f32 %v1181, %v1811
      %v1813 = vand.u32 %v1812, 4294901760
      %1814 = vmatmul.mubr.f32.gmra.mrb[0].mxu0 %v1813
      %v1815 = vpop.f32.mrb[0].mxu0
      %v1816 = vadd.f32 %v1705, %v1815
      %v1817 = vpop.f32.mrb[0].mxu0
      %1818 = vmatprep.mubr.f32.mxu0 0.0
      %v1819 = vand.u32 %v1182, 4294901760
      %v1820 = vsub.f32 %v1182, %v1819
      %v1821 = vand.u32 %v1820, 4294901760
      %1822 = vmatmul.mubr.f32.gmra.mrb[0].mxu0 %v1821
      %v1823 = vpop.f32.mrb[0].mxu0
      %v1824 = vadd.f32 %v1712, %v1823
      %v1825 = vpop.f32.mrb[0].mxu0
      %1826 = vmatprep.mubr.f32.mxu0 0.0
      %v1827 = vand.u32 %v1183, 4294901760
      %v1828 = vsub.f32 %v1183, %v1827
      %v1829 = vand.u32 %v1828, 4294901760
      %1830 = vmatmul.mubr.f32.gmra.mrb[0].mxu0 %v1829
      %v1831 = vpop.f32.mrb[0].mxu0
      %v1832 = vadd.f32 %v1719, %v1831
      %v1833 = vpop.f32.mrb[0].mxu0
      %1834 = vdwg.mxu0
      %1835 = vmatprep.subr.mxu0 0.0
      %v1836 = vand.u32 %v1291, 4294901760
      %v1837 = vsub.f32 %v1291, %v1836
      %v1838 = vand.u32 %v1837, 4294901760
      %1839 = vmatpush1.msra.mxu0 %v1838
      %1840 = vmatprep.subr.mxu0 0.0
      %v1841 = vand.u32 %v1292, 4294901760
      %v1842 = vsub.f32 %v1292, %v1841
      %v1843 = vand.u32 %v1842, 4294901760
      %1844 = vmatpush1.msra.mxu0 %v1843
      %1845 = vmatprep.subr.mxu0 0.0
      %v1846 = vand.u32 %v1293, 4294901760
      %v1847 = vsub.f32 %v1293, %v1846
      %v1848 = vand.u32 %v1847, 4294901760
      %1849 = vmatpush1.msra.mxu0 %v1848
      %1850 = vmatprep.subr.mxu0 0.0
      %v1851 = vand.u32 %v1294, 4294901760
      %v1852 = vsub.f32 %v1294, %v1851
      %v1853 = vand.u32 %v1852, 4294901760
      %1854 = vmatpush1.msra.mxu0 %v1853
      %1855 = vmatprep.subr.mxu0 0.0
      %v1856 = vand.u32 %v1295, 4294901760
      %v1857 = vsub.f32 %v1295, %v1856
      %v1858 = vand.u32 %v1857, 4294901760
      %1859 = vmatpush1.msra.mxu0 %v1858
      %1860 = vmatprep.subr.mxu0 0.0
      %v1861 = vand.u32 %v1296, 4294901760
      %v1862 = vsub.f32 %v1296, %v1861
      %v1863 = vand.u32 %v1862, 4294901760
      %1864 = vmatpush1.msra.mxu0 %v1863
      %1865 = vmatprep.subr.mxu0 0.0
      %v1866 = vand.u32 %v1297, 4294901760
      %v1867 = vsub.f32 %v1297, %v1866
      %v1868 = vand.u32 %v1867, 4294901760
      %1869 = vmatpush1.msra.mxu0 %v1868
      %1870 = vmatprep.subr.mxu0 0.0
      %v1871 = vand.u32 %v1298, 4294901760
      %v1872 = vsub.f32 %v1298, %v1871
      %v1873 = vand.u32 %v1872, 4294901760
      %1874 = vmatpush1.msra.mxu0 %v1873
      %1875 = vmatprep.subr.mxu0 0.0
      %v1876 = vand.u32 %v1299, 4294901760
      %v1877 = vsub.f32 %v1299, %v1876
      %v1878 = vand.u32 %v1877, 4294901760
      %1879 = vmatpush1.msra.mxu0 %v1878
      %1880 = vmatprep.subr.mxu0 0.0
      %v1881 = vand.u32 %v1300, 4294901760
      %v1882 = vsub.f32 %v1300, %v1881
      %v1883 = vand.u32 %v1882, 4294901760
      %1884 = vmatpush1.msra.mxu0 %v1883
      %1885 = vmatprep.subr.mxu0 0.0
      %v1886 = vand.u32 %v1301, 4294901760
      %v1887 = vsub.f32 %v1301, %v1886
      %v1888 = vand.u32 %v1887, 4294901760
      %1889 = vmatpush1.msra.mxu0 %v1888
      %1890 = vmatprep.subr.mxu0 0.0
      %v1891 = vand.u32 %v1302, 4294901760
      %v1892 = vsub.f32 %v1302, %v1891
      %v1893 = vand.u32 %v1892, 4294901760
      %1894 = vmatpush1.msra.mxu0 %v1893
      %1895 = vmatprep.subr.mxu0 0.0
      %v1896 = vand.u32 %v1303, 4294901760
      %v1897 = vsub.f32 %v1303, %v1896
      %v1898 = vand.u32 %v1897, 4294901760
      %1899 = vmatpush1.msra.mxu0 %v1898
      %1900 = vmatprep.subr.mxu0 0.0
      %v1901 = vand.u32 %v1304, 4294901760
      %v1902 = vsub.f32 %v1304, %v1901
      %v1903 = vand.u32 %v1902, 4294901760
      %1904 = vmatpush1.msra.mxu0 %v1903
      %1905 = vmatprep.subr.mxu0 0.0
      %v1906 = vand.u32 %v1305, 4294901760
      %v1907 = vsub.f32 %v1305, %v1906
      %v1908 = vand.u32 %v1907, 4294901760
      %1909 = vmatpush1.msra.mxu0 %v1908
      %1910 = vmatprep.subr.mxu0 0.0
      %v1911 = vand.u32 %v1306, 4294901760
      %v1912 = vsub.f32 %v1306, %v1911
      %v1913 = vand.u32 %v1912, 4294901760
      %1914 = vmatpush1.msra.mxu0 %v1913
      %1915 = vmatprep.subr.mxu0 0.0
      %1916 = vmatpush1.msra.mxu0 0.0
      %1917 = vmatprep.subr.mxu0 0.0
      %1918 = vmatpush1.msra.mxu0 0.0
      %1919 = vmatprep.subr.mxu0 0.0
      %1920 = vmatpush1.msra.mxu0 0.0
      %1921 = vmatprep.subr.mxu0 0.0
      %1922 = vmatpush1.msra.mxu0 0.0
      %1923 = vmatprep.subr.mxu0 0.0
      %1924 = vmatpush1.msra.mxu0 0.0
      %1925 = vmatprep.subr.mxu0 0.0
      %1926 = vmatpush1.msra.mxu0 0.0
      %1927 = vmatprep.subr.mxu0 0.0
      %1928 = vmatpush1.msra.mxu0 0.0
      %1929 = vmatprep.subr.mxu0 0.0
      %1930 = vmatpush1.msra.mxu0 0.0
      %1931 = vmatprep.subr.mxu0 0.0
      %1932 = vmatpush1.msra.mxu0 0.0
      %1933 = vmatprep.subr.mxu0 0.0
      %1934 = vmatpush1.msra.mxu0 0.0
      %1935 = vmatprep.subr.mxu0 0.0
      %1936 = vmatpush1.msra.mxu0 0.0
      %1937 = vmatprep.subr.mxu0 0.0
      %1938 = vmatpush1.msra.mxu0 0.0
      %1939 = vmatprep.subr.mxu0 0.0
      %1940 = vmatpush1.msra.mxu0 0.0
      %1941 = vmatprep.subr.mxu0 0.0
      %1942 = vmatpush1.msra.mxu0 0.0
      %1943 = vmatprep.subr.mxu0 0.0
      %1944 = vmatpush1.msra.mxu0 0.0
      %1945 = vmatprep.subr.mxu0 0.0
      %1946 = vmatpush1.msra.mxu0 0.0
      %1947 = vmatprep.mubr.f32.mxu0 0.0
      %v1948 = vand.u32 %v1180, 4294901760
      %1949 = vmatmul.mubr.f32.gmra.mrb[0].mxu0 %v1948
      %v1950 = vpop.f32.mrb[0].mxu0
      %v1951 = vadd.f32 %v1808, %v1950
      %v1952 = vpop.f32.mrb[0].mxu0
      %1953 = vmatprep.mubr.f32.mxu0 0.0
      %v1954 = vand.u32 %v1181, 4294901760
      %1955 = vmatmul.mubr.f32.gmra.mrb[0].mxu0 %v1954
      %v1956 = vpop.f32.mrb[0].mxu0
      %v1957 = vadd.f32 %v1816, %v1956
      %v1958 = vpop.f32.mrb[0].mxu0
      %1959 = vmatprep.mubr.f32.mxu0 0.0
      %v1960 = vand.u32 %v1182, 4294901760
      %1961 = vmatmul.mubr.f32.gmra.mrb[0].mxu0 %v1960
      %v1962 = vpop.f32.mrb[0].mxu0
      %v1963 = vadd.f32 %v1824, %v1962
      %v1964 = vpop.f32.mrb[0].mxu0
      %1965 = vmatprep.mubr.f32.mxu0 0.0
      %v1966 = vand.u32 %v1183, 4294901760
      %1967 = vmatmul.mubr.f32.gmra.mrb[0].mxu0 %v1966
      %v1968 = vpop.f32.mrb[0].mxu0
      %v1969 = vadd.f32 %v1832, %v1968
      %v1970 = vpop.f32.mrb[0].mxu0
      %1971 = vdwg.mxu0
      %1972 = vmatprep.subr.mxu0 0.0
      %v1973 = vand.u32 %v1291, 4294901760
      %1974 = vmatpush1.msra.mxu0 %v1973
      %1975 = vmatprep.subr.mxu0 0.0
      %v1976 = vand.u32 %v1292, 4294901760
      %1977 = vmatpush1.msra.mxu0 %v1976
      %1978 = vmatprep.subr.mxu0 0.0
      %v1979 = vand.u32 %v1293, 4294901760
      %1980 = vmatpush1.msra.mxu0 %v1979
      %1981 = vmatprep.subr.mxu0 0.0
      %v1982 = vand.u32 %v1294, 4294901760
      %1983 = vmatpush1.msra.mxu0 %v1982
      %1984 = vmatprep.subr.mxu0 0.0
      %v1985 = vand.u32 %v1295, 4294901760
      %1986 = vmatpush1.msra.mxu0 %v1985
      %1987 = vmatprep.subr.mxu0 0.0
      %v1988 = vand.u32 %v1296, 4294901760
      %1989 = vmatpush1.msra.mxu0 %v1988
      %1990 = vmatprep.subr.mxu0 0.0
      %v1991 = vand.u32 %v1297, 4294901760
      %1992 = vmatpush1.msra.mxu0 %v1991
      %1993 = vmatprep.subr.mxu0 0.0
      %v1994 = vand.u32 %v1298, 4294901760
      %1995 = vmatpush1.msra.mxu0 %v1994
      %1996 = vmatprep.subr.mxu0 0.0
      %v1997 = vand.u32 %v1299, 4294901760
      %1998 = vmatpush1.msra.mxu0 %v1997
      %1999 = vmatprep.subr.mxu0 0.0
      %v2000 = vand.u32 %v1300, 4294901760
      %2001 = vmatpush1.msra.mxu0 %v2000
      %2002 = vmatprep.subr.mxu0 0.0
      %v2003 = vand.u32 %v1301, 4294901760
      %2004 = vmatpush1.msra.mxu0 %v2003
      %2005 = vmatprep.subr.mxu0 0.0
      %v2006 = vand.u32 %v1302, 4294901760
      %2007 = vmatpush1.msra.mxu0 %v2006
      %2008 = vmatprep.subr.mxu0 0.0
      %v2009 = vand.u32 %v1303, 4294901760
      %2010 = vmatpush1.msra.mxu0 %v2009
      %2011 = vmatprep.subr.mxu0 0.0
      %v2012 = vand.u32 %v1304, 4294901760
      %2013 = vmatpush1.msra.mxu0 %v2012
      %2014 = vmatprep.subr.mxu0 0.0
      %v2015 = vand.u32 %v1305, 4294901760
      %2016 = vmatpush1.msra.mxu0 %v2015
      %2017 = vmatprep.subr.mxu0 0.0
      %v2018 = vand.u32 %v1306, 4294901760
      %2019 = vmatpush1.msra.mxu0 %v2018
      %2020 = vmatprep.subr.mxu0 0.0
      %2021 = vmatpush1.msra.mxu0 0.0
      %2022 = vmatprep.subr.mxu0 0.0
      %2023 = vmatpush1.msra.mxu0 0.0
      %2024 = vmatprep.subr.mxu0 0.0
      %2025 = vmatpush1.msra.mxu0 0.0
      %2026 = vmatprep.subr.mxu0 0.0
      %2027 = vmatpush1.msra.mxu0 0.0
      %2028 = vmatprep.subr.mxu0 0.0
      %2029 = vmatpush1.msra.mxu0 0.0
      %2030 = vmatprep.subr.mxu0 0.0
      %2031 = vmatpush1.msra.mxu0 0.0
      %2032 = vmatprep.subr.mxu0 0.0
      %2033 = vmatpush1.msra.mxu0 0.0
      %2034 = vmatprep.subr.mxu0 0.0
      %2035 = vmatpush1.msra.mxu0 0.0
      %2036 = vmatprep.subr.mxu0 0.0
      %2037 = vmatpush1.msra.mxu0 0.0
      %2038 = vmatprep.subr.mxu0 0.0
      %2039 = vmatpush1.msra.mxu0 0.0
      %2040 = vmatprep.subr.mxu0 0.0
      %2041 = vmatpush1.msra.mxu0 0.0
      %2042 = vmatprep.subr.mxu0 0.0
      %2043 = vmatpush1.msra.mxu0 0.0
      %2044 = vmatprep.subr.mxu0 0.0
      %2045 = vmatpush1.msra.mxu0 0.0
      %2046 = vmatprep.subr.mxu0 0.0
      %2047 = vmatpush1.msra.mxu0 0.0
      %2048 = vmatprep.subr.mxu0 0.0
      %2049 = vmatpush1.msra.mxu0 0.0
      %2050 = vmatprep.subr.mxu0 0.0
      %2051 = vmatpush1.msra.mxu0 0.0
      %2052 = vmatprep.mubr.f32.mxu0 0.0
      %v2053 = vand.u32 %v1180, 4294901760
      %2054 = vmatmul.mubr.f32.gmra.mrb[0].mxu0 %v2053
      %v2055 = vpop.f32.mrb[0].mxu0
      %v2056 = vadd.f32 %v1951, %v2055
      %v2057 = vpop.f32.mrb[0].mxu0
      %2058 = vmatprep.mubr.f32.mxu0 0.0
      %v2059 = vand.u32 %v1181, 4294901760
      %2060 = vmatmul.mubr.f32.gmra.mrb[0].mxu0 %v2059
      %v2061 = vpop.f32.mrb[0].mxu0
      %v2062 = vadd.f32 %v1957, %v2061
      %v2063 = vpop.f32.mrb[0].mxu0
      %2064 = vmatprep.mubr.f32.mxu0 0.0
      %v2065 = vand.u32 %v1182, 4294901760
      %2066 = vmatmul.mubr.f32.gmra.mrb[0].mxu0 %v2065
      %v2067 = vpop.f32.mrb[0].mxu0
      %v2068 = vadd.f32 %v1963, %v2067
      %v2069 = vpop.f32.mrb[0].mxu0
      %2070 = vmatprep.mubr.f32.mxu0 0.0
      %v2071 = vand.u32 %v1183, 4294901760
      %2072 = vmatmul.mubr.f32.gmra.mrb[0].mxu0 %v2071
      %v2073 = vpop.f32.mrb[0].mxu0
      %v2074 = vadd.f32 %v1969, %v2073
      %v2075 = vpop.f32.mrb[0].mxu0
      %2076 = vdwg.mxu0
      %v2077 = vld [vmem:[%s8] sm:$0x1]
      %v2079 = vlaneseq
      %v2080 = vshrl.u32 %v2079, 7
      %v2081 = vsub.s32 0, %v2080
      %v2082 = vrot.slane %v2077, %v2081
      %v2084 = vmul.f32 %v2056, %v2082
      %v2085 = vmul.f32 %v2062, %v2082
      %v2086 = vmul.f32 %v2068, %v2082
      %v2087 = vmul.f32 %v2074, %v2082
      %v2088 = vld [vmem:[%s9] sm:$0x1]
      %v2090 = vlaneseq
      %v2091 = vshrl.u32 %v2090, 7
      %v2092 = vsub.s32 0, %v2091
      %v2093 = vrot.slane %v2088, %v2092
      %v2095 = vadd.f32 %v2084, %v2093
      %v2096 = vadd.f32 %v2085, %v2093
      %v2097 = vadd.f32 %v2086, %v2093
      %v2098 = vadd.f32 %v2087, %v2093
      %v2099 = vmax.f32 %v2095, 0.0
      %v2100 = vmax.f32 %v2096, 0.0
      %v2101 = vmax.f32 %v2097, 0.0
      %v2102 = vmax.f32 %v2098, 0.0
      %v2103 = vmin.f32 %v2099, 6.0
      %v2104 = vmin.f32 %v2100, 6.0
      %v2105 = vmin.f32 %v2101, 6.0
      %v2106 = vmin.f32 %v2102, 6.0
      %v2107 = vxor.u32 %v2103, 2147483648
      %v2108 = vxor.u32 %v2104, 2147483648
      %v2109 = vxor.u32 %v2105, 2147483648
      %v2110 = vxor.u32 %v2106, 2147483648
      %v2111 = vmul.f32 %v2107, 1.442695
      %v2112 = vpow.pop %v2111
      %v2113 = vmul.f32 %v2108, 1.442695
      %v2114 = vpow.pop %v2113
      %v2115 = vmul.f32 %v2109, 1.442695
      %v2116 = vpow.pop %v2115
      %v2117 = vmul.f32 %v2110, 1.442695
      %v2118 = vpow.pop %v2117
      %v2119 = vadd.f32 %v2112, 1.0
      %v2120 = vadd.f32 %v2114, 1.0
      %v2121 = vadd.f32 %v2116, 1.0
      %v2122 = vadd.f32 %v2118, 1.0
      %v2123 = vrcp.pop %v2119
      %v2124 = vmul.f32 1.0, %v2123
      %v2125 = vrcp.pop %v2120
      %v2126 = vmul.f32 1.0, %v2125
      %v2127 = vrcp.pop %v2121
      %v2128 = vmul.f32 1.0, %v2127
      %v2129 = vrcp.pop %v2122
      %v2130 = vmul.f32 1.0, %v2129
      %v2131 = vmul.f32 %v2124, %v1180
      %v2132 = vmul.f32 %v2126, %v1181
      %v2133 = vmul.f32 %v2128, %v1182
      %v2134 = vmul.f32 %v2130, %v1183
      %v2135 = vadd.f32 %v1287, %v2131
      %v2136 = vadd.f32 %v1288, %v2132
      %v2137 = vadd.f32 %v1289, %v2133
      %v2138 = vadd.f32 %v1290, %v2134
      %2139 = vst [vmem:[%s359] sm:$0xff] %v2135
      %2140 = vst [vmem:[%s359 + $0x8] sm:$0xff] %v2136
      %2141 = vst [vmem:[%s359 + $0x10] sm:$0xff] %v2137
      %2142 = vst [vmem:[%s359 + $0x18] sm:$0xff] %v2138
      %p2143 = scmp.lt.s32.totalorder %s21, 1
      %s2144 = scalar_select %p2143, %s21, 1
      %s2145 = smul.addr %s2144, 4
      %s2146 = smul.addr %s2145, 8
      %s2147 = scalar_lea.vmem %s10, %s2146
      // Predicated region
      $region61: #{unet_block_encode_bottleneck.1} parent=59 // pred_check
        %p2148 = pneg %p254
      $region62: #{unet_block_encode_bottleneck.1} parent=59 // pred_check_branch
        %2150 = sbr.rel (%p2148) target = $region64
      $region63: #{unet_block_encode_bottleneck.1} parent=59 // pred_region
        _
      $region64: #{unet_block_encode_bottleneck.1} parent=59 // pred_fallthru
        _
    $region60: #{unet_block_encode_bottleneck.1} parent=5 // pred_fallthru
      _
    %p2151 = scmp.le.s32.totalorder 2, %s16
    // Predicated region
    $region65: #{unet_block_encode_bottleneck.1} parent=5 // pred_check
      %p2152 = pneg %p2151
    $region66: #{unet_block_encode_bottleneck.1} parent=5 // pred_check_branch
      %2154 = sbr.rel (%p2152) target = $region68
    $region67: #{unet_block_encode_bottleneck.1} parent=5 // pred_region
      %s2155 = ssub.s32 %s16, 2
      // Predicated region
      $region69: #{unet_block_encode_bottleneck.1} parent=67 // pred_check
        %p2156 = pneg %p260
      $region70: #{unet_block_encode_bottleneck.1} parent=67 // pred_check_branch
        %2158 = sbr.rel (%p2156) target = $region72
      $region71: #{unet_block_encode_bottleneck.1} parent=67 // pred_region
        %p2159 = scmp.lt.s32.totalorder %s22, 1
        %s2160 = scalar_select %p2159, %s22, 1
        %s2161 = smul.addr %s2160, 4
        %s2162 = smul.addr %s2161, 8
        %s2163 = scalar_lea.vmem %s10, %s2162
      $region72: #{unet_block_encode_bottleneck.1} parent=67 // pred_fallthru
        _
    $region68: #{unet_block_encode_bottleneck.1} parent=5 // pred_fallthru
      _
  $region6: #{unet_block_encode_bottleneck.1} parent=0 // loop_footer
    %s20 = sadd.s32 1, %s16
  $region7: #{unet_block_encode_bottleneck.1} parent=0 // loop_footer_branch
    %15 = sbr.rel target = $region3
  $region8: #{unet_block_encode_bottleneck.1} parent=0 // loop_exit
    _

</llo_original>
